<compile_context>
chip_gen: v5e
topology: v5e:2x2
jax: 0.10.0
libtpu: 0.0.40
codegen_flags: <defaults>
</compile_context>

<pallas_src>
import jax
import jax.numpy as jnp
from jax import lax
from jax.experimental import pallas as pl
from jax.experimental.pallas import tpu as pltpu

_GC_WEIGHTS = {8: [1, 2, 4, 8], 1: [1, 1, 1, 1], 16: [1, 1, 4, 16],
               32: [1, 2, 8, 32], 64: [1, 4, 16, 64]}

# Scoped to the in-kernel MXU contractions only (not a global config change).
_DOT_PREC = jax.lax.Precision.HIGHEST


def _avg_pool(x, k):
    """F.avg_pool2d(x, k): stride=k, no padding, floor mode."""
    B, C, H, W = x.shape
    Hc, Wc = (H // k) * k, (W // k) * k
    xc = x[:, :, :Hc, :Wc]
    return xc.reshape(B, C, H // k, k, W // k, k).mean(axis=(3, 5))


def _build_tail(x, scale, gc_w):
    """Pooled multi-scale copies of x, flattened + concatenated along the
    spatial axis.  This is only ~HW/3 elements (x itself is NOT copied).
    Returns (tail (B,C,T), wvec (1,T) per-position scale weight)."""
    w = _GC_WEIGHTS[gc_w]
    B, C, H, W = x.shape
    parts, wparts = [], []
    for ms in range(scale):
        k = 2 ** (ms + 1)
        xp = _avg_pool(x, k)
        s_ms = xp.shape[2] * xp.shape[3]
        parts.append(xp.reshape(B, C, s_ms))
        wparts.append(jnp.full((s_ms,), float(w[ms + 1]), jnp.float32))
    tail = jnp.concatenate(parts, axis=-1)
    wvec = jnp.concatenate(wparts).reshape(1, -1)
    return tail, wvec


def _vmem_capacity_bytes():
    try:
        return int(pltpu.get_tpu_info().vmem_capacity_bytes)
    except Exception:
        return 64 << 20  # conservative fallback (v7x per-TensorCore physical VMEM)


def _pick_batch_block(B, per_batch_bytes, target_bytes=2 << 20):
    """Largest divisor of B whose block stays under target (amortizes ~0.35us
    per-grid-step overhead at small shapes).  For B >= 4 keep >= 2 grid steps so
    both v7x TensorCores get work on the 'parallel' batch axis."""
    min_steps = 2 if B >= 4 else 1
    bt = 1
    for d in range(1, B + 1):
        if B % d == 0 and d * per_batch_bytes <= target_bytes and B // d >= min_steps:
            bt = d
    return bt


def context_block_forward(x, params, *, scale, gc_w):
    """x: (B, C, H, W) float32.  Returns (B, C, H, W)."""
    assert 1 <= scale <= 3, "weight table supports scale in [1, 3]"
    B, C, H, W = x.shape
    HW = H * W
    hidden = params["w1"].shape[0]

    x_flat = x.reshape(B, C, HW)                 # free reshape, no copy/pad
    tail, wvec = _build_tail(x, scale, gc_w)     # small (~HW/3 per batch)
    T = tail.shape[-1]

    # ---- batch blocking --------------------------------------------------
    per_batch_bytes = C * (2 * HW + T) * 4       # x block + out block + tail block
    Bt = _pick_batch_block(B, per_batch_bytes)
    grid = (B // Bt,)

    # ---- VMEM budget (blocks double-buffered by default) ------------------
    big_bytes = Bt * C * (2 * HW + T) * 4
    small_bytes = 4 * (T + C + hidden * C + 3 * hidden + C * hidden + C)  # wvec + weights
    cap = _vmem_capacity_bytes()                 # 128 MiB v5e/v6e, 64 MiB v7x
    usable = max(cap - (16 << 20), 32 << 20)     # headroom for Mosaic internal scratch
    need_db = 2 * (big_bytes + small_bytes) + (2 << 20)
    if need_db <= usable:
        big_pipeline = {}                        # default double buffering
        vmem_limit = need_db
    else:
        # Single-buffer the large x/tail/out blocks: in-core compute is tiny vs
        # the DMA, so losing the overlap costs a few % but halves the footprint.
        big_pipeline = {"pipeline_mode": pl.Buffered(1)}
        vmem_limit = big_bytes + 2 * small_bytes + (2 << 20)
        # TODO(synk): if even the single-buffered footprint exceeds `usable`
        # (very large C*H*W, esp. v7x's 64 MiB), restructure as a flash-style
        # online softmax over spatial tiles + a separately tiled x+add pass.
    vmem_limit = int(min(max(vmem_limit, 16 << 20), usable))

    def kernel(x_ref, t_ref, wt_ref, wm_ref, bm_ref, w1_ref, b1_ref,
               gamma_ref, beta_ref, w2_ref, b2_ref, o_ref):
        wm = wm_ref[...]                  # (1, C)  conv_mask weight
        bm = bm_ref[0]                    # scalar  conv_mask bias (SMEM)
        wt = wt_ref[...]                  # (1, T)  per-position scale weight
        w1 = w1_ref[...]; b1 = b1_ref[...]
        gamma = gamma_ref[...]; beta = beta_ref[...]
        w2 = w2_ref[...]; b2 = b2_ref[...]

        # Static unroll over the Bt batch elements of this block; every
        # contraction below is a plain 2-D MXU matmul.
        for b in range(Bt):
            xs = x_ref[b]                 # (C, HW)
            ts = t_ref[b]                 # (C, T)

            # ---- weighted multi-scale attention pool (joint softmax over the
            # x segment and the pooled tail, computed without a concat) ----
            lx = jnp.dot(wm, xs, preferred_element_type=jnp.float32,
                         precision=_DOT_PREC) + bm                       # (1, HW)
            lt = (jnp.dot(wm, ts, preferred_element_type=jnp.float32,
                          precision=_DOT_PREC) + bm) * wt                # (1, T)
            m = jnp.maximum(jnp.max(lx, axis=-1, keepdims=True),
                            jnp.max(lt, axis=-1, keepdims=True))         # (1, 1)
            ex = jnp.exp(lx - m)
            et = jnp.exp(lt - m)
            denom = (jnp.sum(ex, axis=-1, keepdims=True)
                     + jnp.sum(et, axis=-1, keepdims=True))              # (1, 1)
            inv = pl.reciprocal(denom, approx=True)       # EUP slot (free)
            inv = inv * (2.0 - denom * inv)               # Newton step -> ~f32 exact
            # context = [x | tail] @ softmax^T as two MXU contractions; the
            # probabilities are never materialized across C rows.
            ctx = (lax.dot_general(xs, ex, (((1,), (1,)), ((), ())),
                                   preferred_element_type=jnp.float32,
                                   precision=_DOT_PREC)
                   + lax.dot_general(ts, et, (((1,), (1,)), ((), ())),
                                     preferred_element_type=jnp.float32,
                                     precision=_DOT_PREC)) * inv         # (C, 1)

            # ---- channel_add_conv: Conv1x1 -> LayerNorm([C//r,1,1]) -> ReLU -> Conv1x1
            h = jnp.dot(w1, ctx, preferred_element_type=jnp.float32,
                        precision=_DOT_PREC) + b1                        # (Cr, 1)
            mu = jnp.mean(h, axis=0, keepdims=True)
            var = jnp.mean((h - mu) ** 2, axis=0, keepdims=True)
            hn = (h - mu) * lax.rsqrt(var + 1e-5)
            hn = hn * gamma + beta
            hn = jnp.maximum(hn, 0.0)
            add = jnp.dot(w2, hn, preferred_element_type=jnp.float32,
                          precision=_DOT_PREC) + b2                      # (C, 1)

            # ---- fusion: out = x + channel_add_term (exact HW extent, no pad)
            o_ref[b] = (xs + add).astype(o_ref.dtype)

    out = pl.pallas_call(
        kernel,
        out_shape=jax.ShapeDtypeStruct((B, C, HW), x.dtype),
        grid_spec=pltpu.PrefetchScalarGridSpec(
            num_scalar_prefetch=0,
            grid=grid,
            in_specs=[
                pl.BlockSpec((Bt, C, HW), lambda b: (b, 0, 0), **big_pipeline),  # x
                pl.BlockSpec((Bt, C, T), lambda b: (b, 0, 0), **big_pipeline),   # pooled tail
                pl.BlockSpec((1, T), lambda b: (0, 0)),              # per-position scale weight
                pl.BlockSpec((1, C), lambda b: (0, 0)),              # conv_mask weight
                pl.BlockSpec(memory_space=pltpu.MemorySpace.SMEM),   # conv_mask bias (scalar)
                pl.BlockSpec((hidden, C), lambda b: (0, 0)),         # add-conv1 weight
                pl.BlockSpec((hidden, 1), lambda b: (0, 0)),         # add-conv1 bias
                pl.BlockSpec((hidden, 1), lambda b: (0, 0)),         # LayerNorm gamma
                pl.BlockSpec((hidden, 1), lambda b: (0, 0)),         # LayerNorm beta
                pl.BlockSpec((C, hidden), lambda b: (0, 0)),         # add-conv2 weight
                pl.BlockSpec((C, 1), lambda b: (0, 0)),              # add-conv2 bias
            ],
            out_specs=pl.BlockSpec((Bt, C, HW), lambda b: (b, 0, 0), **big_pipeline),
        ),
        compiler_params=pltpu.CompilerParams(
            dimension_semantics=("parallel",),
            vmem_limit_bytes=vmem_limit),
    )(x_flat, tail, wvec, params["wm"], params["bm"], params["w1"], params["b1"],
      params["gamma"], params["beta"], params["w2"], params["b2"])

    return out.reshape(B, C, H, W)   # free reshape (contiguous), no slice


def init_params(key, inplanes, planes, ratio=8):
    hidden = planes // ratio
    ks = jax.random.split(key, 8)
    s = 0.1
    return {
        # conv_mask: Conv2d(C, 1, 1)
        "wm": s * jax.random.normal(ks[0], (1, inplanes), jnp.float32),
        "bm": s * jax.random.normal(ks[1], (1,), jnp.float32),
        # channel_add_conv[0]: Conv2d(C, C//r, 1)
        "w1": s * jax.random.normal(ks[2], (hidden, inplanes), jnp.float32),
        "b1": s * jax.random.normal(ks[3], (hidden, 1), jnp.float32),
        # channel_add_conv[1]: LayerNorm([C//r, 1, 1]) affine params
        "gamma": 1.0 + s * jax.random.normal(ks[4], (hidden, 1), jnp.float32),
        "beta": s * jax.random.normal(ks[5], (hidden, 1), jnp.float32),
        # channel_add_conv[3]: Conv2d(C//r, C, 1)
        "w2": s * jax.random.normal(ks[6], (inplanes, hidden), jnp.float32),
        "b2": s * jax.random.normal(ks[7], (inplanes, 1), jnp.float32),
    }


def ref_forward(x, params, *, scale, gc_w):
    """Pure-JAX reference mirroring the PyTorch WMS_ContextBlock2d
    (att pool with weighted multi-scale concat, channel_add fusion)."""
    w = _GC_WEIGHTS[gc_w]
    B, C, H, W = x.shape
    wm, bm = params["wm"], params["bm"]
    prec = jax.lax.Precision.HIGHEST

    feats = [x.reshape(B, C, H * W)]
    masks = [jnp.einsum("oc,bcs->bos", wm, feats[0], precision=prec) + bm[0]]
    for ms in range(scale):
        k = 2 ** (ms + 1)
        xp = _avg_pool(x, k)
        sp = xp.shape[2] * xp.shape[3]
        fp = xp.reshape(B, C, sp)
        feats.append(fp)
        masks.append(float(w[ms + 1]) *
                     (jnp.einsum("oc,bcs->bos", wm, fp, precision=prec) + bm[0]))
    feat = jnp.concatenate(feats, axis=-1)          # (B, C, S)
    mask = jnp.concatenate(masks, axis=-1)          # (B, 1, S)
    p = jax.nn.softmax(mask, axis=-1)
    ctx = jnp.einsum("bcs,bos->bc", feat, p, precision=prec)        # (B, C)

    h = jnp.einsum("bc,hc->bh", ctx, params["w1"], precision=prec) + params["b1"][:, 0]
    mu = h.mean(-1, keepdims=True)
    var = ((h - mu) ** 2).mean(-1, keepdims=True)
    hn = (h - mu) / jnp.sqrt(var + 1e-5)
    hn = hn * params["gamma"][:, 0] + params["beta"][:, 0]
    hn = jnp.maximum(hn, 0.0)
    add = jnp.einsum("bh,ch->bc", hn, params["w2"], precision=prec) + params["b2"][:, 0]
    return x + add[:, :, None, None]


if __name__ == "__main__":
    # inplanes = planes = 32, ratio = 8 -> hidden = 4; HW = 196 (exercises the
    # non-multiple-of-128 lane extents); scale = 2, gc_w = 8 exercises the
    # weighted multi-scale pool; B = 2 exercises the batch-blocked kernel path.
    B, C, H, W = 2, 32, 14, 14
    SCALE, GC_W = 2, 8

    key = jax.random.PRNGKey(0)
    kx, kp = jax.random.split(key)
    x = jax.random.normal(kx, (B, C, H, W), jnp.float32)
    params = init_params(kp, inplanes=C, planes=C, ratio=8)

    out = context_block_forward(x, params, scale=SCALE, gc_w=GC_W)
    out = jax.block_until_ready(out)

    ref = ref_forward(x, params, scale=SCALE, gc_w=GC_W)
    assert out.shape == (B, C, H, W)
    max_err = float(jnp.max(jnp.abs(out - ref)))
    assert jnp.allclose(out, ref, atol=2e-4, rtol=2e-4), (
        f"mismatch vs reference (max abs err {max_err})")

    print("KERNEL_OK")
</pallas_src>

<mosaic_0001>
module attributes {stable_mosaic.version = 11 : i64} {
  func.func @kernel(%arg0: i32, %arg1: memref<2x32x196xf32, #tpu.memory_space<vmem>>, %arg2: memref<2x32x58xf32, #tpu.memory_space<vmem>>, %arg3: memref<1x58xf32, #tpu.memory_space<vmem>>, %arg4: memref<1x32xf32, #tpu.memory_space<vmem>>, %arg5: memref<1xf32, #tpu.memory_space<smem>>, %arg6: memref<4x32xf32, #tpu.memory_space<vmem>>, %arg7: memref<4x1xf32, #tpu.memory_space<vmem>>, %arg8: memref<4x1xf32, #tpu.memory_space<vmem>>, %arg9: memref<4x1xf32, #tpu.memory_space<vmem>>, %arg10: memref<32x4xf32, #tpu.memory_space<vmem>>, %arg11: memref<32x1xf32, #tpu.memory_space<vmem>>, %arg12: memref<2x32x196xf32, #tpu.memory_space<vmem>>) attributes {dimension_semantics = [#tpu.dimension_semantics<parallel>], iteration_bounds = array<i64: 1>, scalar_prefetch = 0 : i64, scratch_operands = 0 : i64, tpu.core_type = #tpu.core_type<tc>, window_params = [{transform_indices = @transform_0, window_bounds = array<i64: 2, 32, 196>}, {transform_indices = @transform_1, window_bounds = array<i64: 2, 32, 58>}, {pipeline_mode = #tpu.pipeline_mode<synchronous>, transform_indices = @transform_2, window_bounds = array<i64: 1, 58>}, {pipeline_mode = #tpu.pipeline_mode<synchronous>, transform_indices = @transform_3, window_bounds = array<i64: 1, 32>}, {transform_indices = @transform_4, window_bounds = array<i64: 1>}, {pipeline_mode = #tpu.pipeline_mode<synchronous>, transform_indices = @transform_5, window_bounds = array<i64: 4, 32>}, {pipeline_mode = #tpu.pipeline_mode<synchronous>, transform_indices = @transform_6, window_bounds = array<i64: 4, 1>}, {pipeline_mode = #tpu.pipeline_mode<synchronous>, transform_indices = @transform_7, window_bounds = array<i64: 4, 1>}, {pipeline_mode = #tpu.pipeline_mode<synchronous>, transform_indices = @transform_8, window_bounds = array<i64: 4, 1>}, {pipeline_mode = #tpu.pipeline_mode<synchronous>, transform_indices = @transform_9, window_bounds = array<i64: 32, 4>}, {pipeline_mode = #tpu.pipeline_mode<synchronous>, transform_indices = @transform_10, window_bounds = array<i64: 32, 1>}, {transform_indices = @transform_11, window_bounds = array<i64: 2, 32, 196>}]} {
    %c0 = arith.constant 0 : index
    %c0_0 = arith.constant 0 : index
    %0 = vector.load %arg4[%c0, %c0_0] : memref<1x32xf32, #tpu.memory_space<vmem>>, vector<1x32xf32>
    %c0_1 = arith.constant 0 : index
    %1 = memref.load %arg5[%c0_1] : memref<1xf32, #tpu.memory_space<smem>>
    %c0_2 = arith.constant 0 : index
    %c0_3 = arith.constant 0 : index
    %2 = vector.load %arg3[%c0_2, %c0_3] : memref<1x58xf32, #tpu.memory_space<vmem>>, vector<1x58xf32>
    %c0_4 = arith.constant 0 : index
    %c0_5 = arith.constant 0 : index
    %3 = vector.load %arg6[%c0_4, %c0_5] : memref<4x32xf32, #tpu.memory_space<vmem>>, vector<4x32xf32>
    %c0_6 = arith.constant 0 : index
    %c0_7 = arith.constant 0 : index
    %4 = vector.load %arg7[%c0_6, %c0_7] : memref<4x1xf32, #tpu.memory_space<vmem>>, vector<4x1xf32>
    %c0_8 = arith.constant 0 : index
    %c0_9 = arith.constant 0 : index
    %5 = vector.load %arg8[%c0_8, %c0_9] : memref<4x1xf32, #tpu.memory_space<vmem>>, vector<4x1xf32>
    %c0_10 = arith.constant 0 : index
    %c0_11 = arith.constant 0 : index
    %6 = vector.load %arg9[%c0_10, %c0_11] : memref<4x1xf32, #tpu.memory_space<vmem>>, vector<4x1xf32>
    %c0_12 = arith.constant 0 : index
    %c0_13 = arith.constant 0 : index
    %7 = vector.load %arg10[%c0_12, %c0_13] : memref<32x4xf32, #tpu.memory_space<vmem>>, vector<32x4xf32>
    %c0_14 = arith.constant 0 : index
    %c0_15 = arith.constant 0 : index
    %8 = vector.load %arg11[%c0_14, %c0_15] : memref<32x1xf32, #tpu.memory_space<vmem>>, vector<32x1xf32>
    %c0_16 = arith.constant 0 : index
    %c0_17 = arith.constant 0 : index
    %c0_18 = arith.constant 0 : index
    %9 = vector.load %arg1[%c0_16, %c0_17, %c0_18] : memref<2x32x196xf32, #tpu.memory_space<vmem>>, vector<1x32x196xf32>
    %10 = vector.shape_cast %9 : vector<1x32x196xf32> to vector<32x196xf32>
    %c0_19 = arith.constant 0 : index
    %c0_20 = arith.constant 0 : index
    %c0_21 = arith.constant 0 : index
    %11 = vector.load %arg2[%c0_19, %c0_20, %c0_21] : memref<2x32x58xf32, #tpu.memory_space<vmem>>, vector<1x32x58xf32>
    %12 = vector.shape_cast %11 : vector<1x32x58xf32> to vector<32x58xf32>
    %cst = arith.constant dense<0.000000e+00> : vector<1x196xf32>
    %13 = tpu.matmul %0, %10, %cst {dimension_numbers = #tpu.dot_dimension_numbers<[1], [0], [0], [1], [0, 0, 1, 1], [], []>, precision = #tpu.contract_precision<fp32>} : vector<1x32xf32>, vector<32x196xf32>, vector<1x196xf32> -> vector<1x196xf32>
    %14 = vector.broadcast %1 : f32 to vector<1x196xf32>
    %15 = arith.addf %13, %14 : vector<1x196xf32>
    %cst_22 = arith.constant dense<0.000000e+00> : vector<1x58xf32>
    %16 = tpu.matmul %0, %12, %cst_22 {dimension_numbers = #tpu.dot_dimension_numbers<[1], [0], [0], [1], [0, 0, 1, 1], [], []>, precision = #tpu.contract_precision<fp32>} : vector<1x32xf32>, vector<32x58xf32>, vector<1x58xf32> -> vector<1x58xf32>
    %17 = vector.broadcast %1 : f32 to vector<1x58xf32>
    %18 = arith.addf %16, %17 : vector<1x58xf32>
    %19 = arith.mulf %18, %2 : vector<1x58xf32>
    %cst_23 = arith.constant dense<0xFF800000> : vector<1xf32>
    %20 = vector.multi_reduction <maximumf>, %15, %cst_23 [1] : vector<1x196xf32> to vector<1xf32>
    %21 = vector.shape_cast %20 : vector<1xf32> to vector<1x1xf32>
    %cst_24 = arith.constant dense<0xFF800000> : vector<1xf32>
    %22 = vector.multi_reduction <maximumf>, %19, %cst_24 [1] : vector<1x58xf32> to vector<1xf32>
    %23 = vector.shape_cast %22 : vector<1xf32> to vector<1x1xf32>
    %24 = arith.maximumf %21, %23 : vector<1x1xf32>
    %25 = vector.broadcast %24 : vector<1x1xf32> to vector<1x196xf32>
    %26 = arith.subf %15, %25 : vector<1x196xf32>
    %27 = math.exp %26 : vector<1x196xf32>
    %28 = vector.broadcast %24 : vector<1x1xf32> to vector<1x58xf32>
    %29 = arith.subf %19, %28 : vector<1x58xf32>
    %30 = math.exp %29 : vector<1x58xf32>
    %cst_25 = arith.constant dense<0.000000e+00> : vector<1xf32>
    %31 = vector.multi_reduction <add>, %27, %cst_25 [1] : vector<1x196xf32> to vector<1xf32>
    %32 = vector.shape_cast %31 : vector<1xf32> to vector<1x1xf32>
    %cst_26 = arith.constant dense<0.000000e+00> : vector<1xf32>
    %33 = vector.multi_reduction <add>, %30, %cst_26 [1] : vector<1x58xf32> to vector<1xf32>
    %34 = vector.shape_cast %33 : vector<1xf32> to vector<1x1xf32>
    %35 = arith.addf %32, %34 : vector<1x1xf32>
    %36 = tpu.reciprocal %35 {approx = true} : vector<1x1xf32> -> vector<1x1xf32>
    %37 = arith.mulf %35, %36 : vector<1x1xf32>
    %cst_27 = arith.constant 2.000000e+00 : f32
    %38 = vector.broadcast %cst_27 : f32 to vector<1x1xf32>
    %39 = arith.subf %38, %37 : vector<1x1xf32>
    %40 = arith.mulf %36, %39 : vector<1x1xf32>
    %cst_28 = arith.constant dense<0.000000e+00> : vector<32x1xf32>
    %41 = tpu.matmul %10, %27, %cst_28 {dimension_numbers = #tpu.dot_dimension_numbers<[1], [1], [0], [0], [0, 0, 1, 0], [], []>, precision = #tpu.contract_precision<fp32>} : vector<32x196xf32>, vector<1x196xf32>, vector<32x1xf32> -> vector<32x1xf32>
    %cst_29 = arith.constant dense<0.000000e+00> : vector<32x1xf32>
    %42 = tpu.matmul %12, %30, %cst_29 {dimension_numbers = #tpu.dot_dimension_numbers<[1], [1], [0], [0], [0, 0, 1, 0], [], []>, precision = #tpu.contract_precision<fp32>} : vector<32x58xf32>, vector<1x58xf32>, vector<32x1xf32> -> vector<32x1xf32>
    %43 = arith.addf %41, %42 : vector<32x1xf32>
    %44 = vector.broadcast %40 : vector<1x1xf32> to vector<32x1xf32>
    %45 = arith.mulf %43, %44 : vector<32x1xf32>
    %cst_30 = arith.constant dense<0.000000e+00> : vector<4x1xf32>
    %46 = tpu.matmul %3, %45, %cst_30 {dimension_numbers = #tpu.dot_dimension_numbers<[1], [0], [0], [1], [0, 0, 1, 1], [], []>, precision = #tpu.contract_precision<fp32>} : vector<4x32xf32>, vector<32x1xf32>, vector<4x1xf32> -> vector<4x1xf32>
    %47 = arith.addf %46, %4 : vector<4x1xf32>
    %cst_31 = arith.constant dense<0.000000e+00> : vector<1xf32>
    %48 = vector.multi_reduction <add>, %47, %cst_31 [0] : vector<4x1xf32> to vector<1xf32>
    %49 = vector.shape_cast %48 : vector<1xf32> to vector<1x1xf32>
    %cst_32 = arith.constant 4.000000e+00 : f32
    %50 = vector.broadcast %cst_32 : f32 to vector<1x1xf32>
    %51 = arith.divf %49, %50 : vector<1x1xf32>
    %52 = vector.broadcast %51 : vector<1x1xf32> to vector<4x1xf32>
    %53 = arith.subf %47, %52 : vector<4x1xf32>
    %54 = arith.mulf %53, %53 : vector<4x1xf32>
    %cst_33 = arith.constant dense<0.000000e+00> : vector<1xf32>
    %55 = vector.multi_reduction <add>, %54, %cst_33 [0] : vector<4x1xf32> to vector<1xf32>
    %56 = vector.shape_cast %55 : vector<1xf32> to vector<1x1xf32>
    %cst_34 = arith.constant 4.000000e+00 : f32
    %57 = vector.broadcast %cst_34 : f32 to vector<1x1xf32>
    %58 = arith.divf %56, %57 : vector<1x1xf32>
    %59 = vector.broadcast %51 : vector<1x1xf32> to vector<4x1xf32>
    %60 = arith.subf %47, %59 : vector<4x1xf32>
    %cst_35 = arith.constant 9.99999974E-6 : f32
    %61 = vector.broadcast %cst_35 : f32 to vector<1x1xf32>
    %62 = arith.addf %58, %61 : vector<1x1xf32>
    %63 = math.rsqrt %62 : vector<1x1xf32>
    %64 = vector.broadcast %63 : vector<1x1xf32> to vector<4x1xf32>
    %65 = arith.mulf %60, %64 : vector<4x1xf32>
    %66 = arith.mulf %65, %5 : vector<4x1xf32>
    %67 = arith.addf %66, %6 : vector<4x1xf32>
    %cst_36 = arith.constant 0.000000e+00 : f32
    %68 = vector.broadcast %cst_36 : f32 to vector<4x1xf32>
    %69 = arith.maximumf %67, %68 : vector<4x1xf32>
    %cst_37 = arith.constant dense<0.000000e+00> : vector<32x1xf32>
    %70 = tpu.matmul %7, %69, %cst_37 {dimension_numbers = #tpu.dot_dimension_numbers<[1], [0], [0], [1], [0, 0, 1, 1], [], []>, precision = #tpu.contract_precision<fp32>} : vector<32x4xf32>, vector<4x1xf32>, vector<32x1xf32> -> vector<32x1xf32>
    %71 = arith.addf %70, %8 : vector<32x1xf32>
    %72 = vector.broadcast %71 : vector<32x1xf32> to vector<32x196xf32>
    %73 = arith.addf %10, %72 : vector<32x196xf32>
    %c0_38 = arith.constant 0 : index
    %c0_39 = arith.constant 0 : index
    %c0_40 = arith.constant 0 : index
    %74 = vector.load %arg12[%c0_38, %c0_39, %c0_40] : memref<2x32x196xf32, #tpu.memory_space<vmem>>, vector<1x32x196xf32>
    %75 = vector.shape_cast %74 : vector<1x32x196xf32> to vector<32x196xf32>
    %76 = vector.shape_cast %73 : vector<32x196xf32> to vector<1x32x196xf32>
    tpu.vector_store %arg12[%c0_38, %c0_39, %c0_40], %76 {strides = array<i32>} : memref<2x32x196xf32, #tpu.memory_space<vmem>>, vector<1x32x196xf32>,
    %c1 = arith.constant 1 : index
    %c0_41 = arith.constant 0 : index
    %c0_42 = arith.constant 0 : index
    %77 = vector.load %arg1[%c1, %c0_41, %c0_42] : memref<2x32x196xf32, #tpu.memory_space<vmem>>, vector<1x32x196xf32>
    %78 = vector.shape_cast %77 : vector<1x32x196xf32> to vector<32x196xf32>
    %c1_43 = arith.constant 1 : index
    %c0_44 = arith.constant 0 : index
    %c0_45 = arith.constant 0 : index
    %79 = vector.load %arg2[%c1_43, %c0_44, %c0_45] : memref<2x32x58xf32, #tpu.memory_space<vmem>>, vector<1x32x58xf32>
    %80 = vector.shape_cast %79 : vector<1x32x58xf32> to vector<32x58xf32>
    %cst_46 = arith.constant dense<0.000000e+00> : vector<1x196xf32>
    %81 = tpu.matmul %0, %78, %cst_46 {dimension_numbers = #tpu.dot_dimension_numbers<[1], [0], [0], [1], [0, 0, 1, 1], [], []>, precision = #tpu.contract_precision<fp32>} : vector<1x32xf32>, vector<32x196xf32>, vector<1x196xf32> -> vector<1x196xf32>
    %82 = vector.broadcast %1 : f32 to vector<1x196xf32>
    %83 = arith.addf %81, %82 : vector<1x196xf32>
    %cst_47 = arith.constant dense<0.000000e+00> : vector<1x58xf32>
    %84 = tpu.matmul %0, %80, %cst_47 {dimension_numbers = #tpu.dot_dimension_numbers<[1], [0], [0], [1], [0, 0, 1, 1], [], []>, precision = #tpu.contract_precision<fp32>} : vector<1x32xf32>, vector<32x58xf32>, vector<1x58xf32> -> vector<1x58xf32>
    %85 = vector.broadcast %1 : f32 to vector<1x58xf32>
    %86 = arith.addf %84, %85 : vector<1x58xf32>
    %87 = arith.mulf %86, %2 : vector<1x58xf32>
    %cst_48 = arith.constant dense<0xFF800000> : vector<1xf32>
    %88 = vector.multi_reduction <maximumf>, %83, %cst_48 [1] : vector<1x196xf32> to vector<1xf32>
    %89 = vector.shape_cast %88 : vector<1xf32> to vector<1x1xf32>
    %cst_49 = arith.constant dense<0xFF800000> : vector<1xf32>
    %90 = vector.multi_reduction <maximumf>, %87, %cst_49 [1] : vector<1x58xf32> to vector<1xf32>
    %91 = vector.shape_cast %90 : vector<1xf32> to vector<1x1xf32>
    %92 = arith.maximumf %89, %91 : vector<1x1xf32>
    %93 = vector.broadcast %92 : vector<1x1xf32> to vector<1x196xf32>
    %94 = arith.subf %83, %93 : vector<1x196xf32>
    %95 = math.exp %94 : vector<1x196xf32>
    %96 = vector.broadcast %92 : vector<1x1xf32> to vector<1x58xf32>
    %97 = arith.subf %87, %96 : vector<1x58xf32>
    %98 = math.exp %97 : vector<1x58xf32>
    %cst_50 = arith.constant dense<0.000000e+00> : vector<1xf32>
    %99 = vector.multi_reduction <add>, %95, %cst_50 [1] : vector<1x196xf32> to vector<1xf32>
    %100 = vector.shape_cast %99 : vector<1xf32> to vector<1x1xf32>
    %cst_51 = arith.constant dense<0.000000e+00> : vector<1xf32>
    %101 = vector.multi_reduction <add>, %98, %cst_51 [1] : vector<1x58xf32> to vector<1xf32>
    %102 = vector.shape_cast %101 : vector<1xf32> to vector<1x1xf32>
    %103 = arith.addf %100, %102 : vector<1x1xf32>
    %104 = tpu.reciprocal %103 {approx = true} : vector<1x1xf32> -> vector<1x1xf32>
    %105 = arith.mulf %103, %104 : vector<1x1xf32>
    %cst_52 = arith.constant 2.000000e+00 : f32
    %106 = vector.broadcast %cst_52 : f32 to vector<1x1xf32>
    %107 = arith.subf %106, %105 : vector<1x1xf32>
    %108 = arith.mulf %104, %107 : vector<1x1xf32>
    %cst_53 = arith.constant dense<0.000000e+00> : vector<32x1xf32>
    %109 = tpu.matmul %78, %95, %cst_53 {dimension_numbers = #tpu.dot_dimension_numbers<[1], [1], [0], [0], [0, 0, 1, 0], [], []>, precision = #tpu.contract_precision<fp32>} : vector<32x196xf32>, vector<1x196xf32>, vector<32x1xf32> -> vector<32x1xf32>
    %cst_54 = arith.constant dense<0.000000e+00> : vector<32x1xf32>
    %110 = tpu.matmul %80, %98, %cst_54 {dimension_numbers = #tpu.dot_dimension_numbers<[1], [1], [0], [0], [0, 0, 1, 0], [], []>, precision = #tpu.contract_precision<fp32>} : vector<32x58xf32>, vector<1x58xf32>, vector<32x1xf32> -> vector<32x1xf32>
    %111 = arith.addf %109, %110 : vector<32x1xf32>
    %112 = vector.broadcast %108 : vector<1x1xf32> to vector<32x1xf32>
    %113 = arith.mulf %111, %112 : vector<32x1xf32>
    %cst_55 = arith.constant dense<0.000000e+00> : vector<4x1xf32>
    %114 = tpu.matmul %3, %113, %cst_55 {dimension_numbers = #tpu.dot_dimension_numbers<[1], [0], [0], [1], [0, 0, 1, 1], [], []>, precision = #tpu.contract_precision<fp32>} : vector<4x32xf32>, vector<32x1xf32>, vector<4x1xf32> -> vector<4x1xf32>
    %115 = arith.addf %114, %4 : vector<4x1xf32>
    %cst_56 = arith.constant dense<0.000000e+00> : vector<1xf32>
    %116 = vector.multi_reduction <add>, %115, %cst_56 [0] : vector<4x1xf32> to vector<1xf32>
    %117 = vector.shape_cast %116 : vector<1xf32> to vector<1x1xf32>
    %cst_57 = arith.constant 4.000000e+00 : f32
    %118 = vector.broadcast %cst_57 : f32 to vector<1x1xf32>
    %119 = arith.divf %117, %118 : vector<1x1xf32>
    %120 = vector.broadcast %119 : vector<1x1xf32> to vector<4x1xf32>
    %121 = arith.subf %115, %120 : vector<4x1xf32>
    %122 = arith.mulf %121, %121 : vector<4x1xf32>
    %cst_58 = arith.constant dense<0.000000e+00> : vector<1xf32>
    %123 = vector.multi_reduction <add>, %122, %cst_58 [0] : vector<4x1xf32> to vector<1xf32>
    %124 = vector.shape_cast %123 : vector<1xf32> to vector<1x1xf32>
    %cst_59 = arith.constant 4.000000e+00 : f32
    %125 = vector.broadcast %cst_59 : f32 to vector<1x1xf32>
    %126 = arith.divf %124, %125 : vector<1x1xf32>
    %127 = vector.broadcast %119 : vector<1x1xf32> to vector<4x1xf32>
    %128 = arith.subf %115, %127 : vector<4x1xf32>
    %cst_60 = arith.constant 9.99999974E-6 : f32
    %129 = vector.broadcast %cst_60 : f32 to vector<1x1xf32>
    %130 = arith.addf %126, %129 : vector<1x1xf32>
    %131 = math.rsqrt %130 : vector<1x1xf32>
    %132 = vector.broadcast %131 : vector<1x1xf32> to vector<4x1xf32>
    %133 = arith.mulf %128, %132 : vector<4x1xf32>
    %134 = arith.mulf %133, %5 : vector<4x1xf32>
    %135 = arith.addf %134, %6 : vector<4x1xf32>
    %cst_61 = arith.constant 0.000000e+00 : f32
    %136 = vector.broadcast %cst_61 : f32 to vector<4x1xf32>
    %137 = arith.maximumf %135, %136 : vector<4x1xf32>
    %cst_62 = arith.constant dense<0.000000e+00> : vector<32x1xf32>
    %138 = tpu.matmul %7, %137, %cst_62 {dimension_numbers = #tpu.dot_dimension_numbers<[1], [0], [0], [1], [0, 0, 1, 1], [], []>, precision = #tpu.contract_precision<fp32>} : vector<32x4xf32>, vector<4x1xf32>, vector<32x1xf32> -> vector<32x1xf32>
    %139 = arith.addf %138, %8 : vector<32x1xf32>
    %140 = vector.broadcast %139 : vector<32x1xf32> to vector<32x196xf32>
    %141 = arith.addf %78, %140 : vector<32x196xf32>
    %c1_63 = arith.constant 1 : index
    %c0_64 = arith.constant 0 : index
    %c0_65 = arith.constant 0 : index
    %142 = vector.load %arg12[%c1_63, %c0_64, %c0_65] : memref<2x32x196xf32, #tpu.memory_space<vmem>>, vector<1x32x196xf32>
    %143 = vector.shape_cast %142 : vector<1x32x196xf32> to vector<32x196xf32>
    %144 = vector.shape_cast %141 : vector<32x196xf32> to vector<1x32x196xf32>
    tpu.vector_store %arg12[%c1_63, %c0_64, %c0_65], %144 {strides = array<i32>} : memref<2x32x196xf32, #tpu.memory_space<vmem>>, vector<1x32x196xf32>,
    return
  }
  func.func @transform_0(%arg0: i32) -> (i32, i32, i32) {
    %c0_i32 = arith.constant 0 : i32
    %c0_i32_0 = arith.constant 0 : i32
    %c0_i32_1 = arith.constant 0 : i32
    return %arg0, %c0_i32, %c0_i32_0 : i32, i32, i32
  }
  func.func @transform_1(%arg0: i32) -> (i32, i32, i32) {
    %c0_i32 = arith.constant 0 : i32
    %c0_i32_0 = arith.constant 0 : i32
    %c0_i32_1 = arith.constant 0 : i32
    return %arg0, %c0_i32, %c0_i32_0 : i32, i32, i32
  }
  func.func @transform_2(%arg0: i32) -> (i32, i32) {
    %c0_i32 = arith.constant 0 : i32
    %c0_i32_0 = arith.constant 0 : i32
    %c0_i32_1 = arith.constant 0 : i32
    return %c0_i32, %c0_i32_0 : i32, i32
  }
  func.func @transform_3(%arg0: i32) -> (i32, i32) {
    %c0_i32 = arith.constant 0 : i32
    %c0_i32_0 = arith.constant 0 : i32
    %c0_i32_1 = arith.constant 0 : i32
    return %c0_i32, %c0_i32_0 : i32, i32
  }
  func.func @transform_4(%arg0: i32) -> i32 {
    %c0_i32 = arith.constant 0 : i32
    %c0_i32_0 = arith.constant 0 : i32
    return %c0_i32 : i32
  }
  func.func @transform_5(%arg0: i32) -> (i32, i32) {
    %c0_i32 = arith.constant 0 : i32
    %c0_i32_0 = arith.constant 0 : i32
    %c0_i32_1 = arith.constant 0 : i32
    return %c0_i32, %c0_i32_0 : i32, i32
  }
  func.func @transform_6(%arg0: i32) -> (i32, i32) {
    %c0_i32 = arith.constant 0 : i32
    %c0_i32_0 = arith.constant 0 : i32
    %c0_i32_1 = arith.constant 0 : i32
    return %c0_i32, %c0_i32_0 : i32, i32
  }
  func.func @transform_7(%arg0: i32) -> (i32, i32) {
    %c0_i32 = arith.constant 0 : i32
    %c0_i32_0 = arith.constant 0 : i32
    %c0_i32_1 = arith.constant 0 : i32
    return %c0_i32, %c0_i32_0 : i32, i32
  }
  func.func @transform_8(%arg0: i32) -> (i32, i32) {
    %c0_i32 = arith.constant 0 : i32
    %c0_i32_0 = arith.constant 0 : i32
    %c0_i32_1 = arith.constant 0 : i32
    return %c0_i32, %c0_i32_0 : i32, i32
  }
  func.func @transform_9(%arg0: i32) -> (i32, i32) {
    %c0_i32 = arith.constant 0 : i32
    %c0_i32_0 = arith.constant 0 : i32
    %c0_i32_1 = arith.constant 0 : i32
    return %c0_i32, %c0_i32_0 : i32, i32
  }
  func.func @transform_10(%arg0: i32) -> (i32, i32) {
    %c0_i32 = arith.constant 0 : i32
    %c0_i32_0 = arith.constant 0 : i32
    %c0_i32_1 = arith.constant 0 : i32
    return %c0_i32, %c0_i32_0 : i32, i32
  }
  func.func @transform_11(%arg0: i32) -> (i32, i32, i32) {
    %c0_i32 = arith.constant 0 : i32
    %c0_i32_0 = arith.constant 0 : i32
    %c0_i32_1 = arith.constant 0 : i32
    return %arg0, %c0_i32, %c0_i32_0 : i32, i32, i32
  }
}

</mosaic_0001>

<llo_original>
// kernel: tpu_custom_call.1
$region0: #{tpu_custom_call.1}
  #allocation0 [shape = 'u32[]', space=smem, size = 0x4, offset = 0x4, fixed_abs, tag = 'smem constant byte address 0x4 - core index']
  #allocation1 [shape = 'u32[72,128]{1,0:T(1,128)}', space=vmem, size = 0x9000, scoped, tag = 'internal scratch']
  #allocation2 [shape = 'f32[1]{0:T(128)S(6)}', space=smem, size = 0x200, scoped, tag = 'scoped memory for tpu_custom_call.1']
  %s0 = inlined_call_operand.hbm [shape: f32[2,32,196], index: 0, kind: input, shape index: {}]
  %s1 = inlined_call_operand.vmem [shape: f32[2,32,58], index: 1, kind: input, shape index: {}]
  %s2 = inlined_call_operand.vmem [shape: f32[1,58], index: 2, kind: input, shape index: {}]
  %s3 = inlined_call_operand.vmem [shape: f32[1,32], index: 3, kind: input, shape index: {}]
  %s4 = inlined_call_operand.<no memory space> [shape: f32[1], index: 4, kind: input, shape index: {}]
  %s5 = inlined_call_operand.vmem [shape: f32[4,32], index: 5, kind: input, shape index: {}]
  %s6 = inlined_call_operand.vmem [shape: f32[4,1], index: 6, kind: input, shape index: {}]
  %s7 = inlined_call_operand.vmem [shape: f32[4,1], index: 7, kind: input, shape index: {}]
  %s8 = inlined_call_operand.vmem [shape: f32[4,1], index: 8, kind: input, shape index: {}]
  %s9 = inlined_call_operand.vmem [shape: f32[32,4], index: 9, kind: input, shape index: {}]
  %s10 = inlined_call_operand.vmem [shape: f32[32,1], index: 10, kind: input, shape index: {}]
  %s11 = inlined_call_operand.hbm [shape: f32[2,32,196], index: 11, kind: output, shape index: {}]
  %s12 = sld [smem:[#allocation0]]
  $region58: #{tpu_custom_call.1} parent=0
    _
  %s14 = ssub.s32 1, %s12
  %s15 = scalar_select 0, %s14, %s12
  %16 = sst [smem:[#allocation2]] %s4
  $region1: #{tpu_custom_call.1} parent=0
    #allocation3 [shape = 'u8[65536]{0}', space=vmem, size = 0x10000, scoped, tag = 'input window, operand 0, single buffered']
    #allocation4 [shape = 's32[1]{0}', space=sflag, size = 0x4, scoped, tag = 'scoped memory for tpu_custom_call.1']
    #allocation5 [shape = 's32[1]{0}', space=sflag, size = 0x4, scoped, tag = 'scoped memory for tpu_custom_call.1']
    #allocation6 [shape = 'u8[65536]{0}', space=vmem, size = 0x10000, scoped, tag = 'output window, operand 0, single buffered']
    %17 = vsyncpa [#allocation4], 0
    %18 = vsyncpa [#allocation5], 0
    // Predicated region
    $region2: #{tpu_custom_call.1} parent=1 // pred_check
      _
    $region3: #{tpu_custom_call.1} parent=1 // pred_check_branch
      %20 = sbr.rel (0) target = $region5
    $region4: #{tpu_custom_call.1} parent=1 // pred_region
      %22 = vsyncadd [#allocation4], 0
      %s23 = sshll.u32 %s0, 4
      %s24 = int_to_ptr.hbm [resolvable:$true] %s23
      %s25 = sshll.u32 [#allocation3], 4
      %s26 = int_to_ptr.vmem [resolvable:$true] %s25
      %31 = dma.hbm_to_vmem [thread:$0]  %s24, 2048, %s26, [#allocation4], 256, 256, 16
    $region5: #{tpu_custom_call.1} parent=1 // pred_fallthru
      _
    // Predicated region
    $region6: #{tpu_custom_call.1} parent=1 // pred_check
      _
    $region7: #{tpu_custom_call.1} parent=1 // pred_check_branch
      %33 = sbr.rel (0) target = $region9
    $region8: #{tpu_custom_call.1} parent=1 // pred_region
      _
    $region9: #{tpu_custom_call.1} parent=1 // pred_fallthru
      _
    // Predicated region
    $region10: #{tpu_custom_call.1} parent=1 // pred_check
      _
    $region11: #{tpu_custom_call.1} parent=1 // pred_check_branch
      %35 = sbr.rel (0) target = $region13
    $region12: #{tpu_custom_call.1} parent=1 // pred_region
      _
    $region13: #{tpu_custom_call.1} parent=1 // pred_fallthru
      _
    // Predicated region
    $region14: #{tpu_custom_call.1} parent=1 // pred_check
      _
    $region15: #{tpu_custom_call.1} parent=1 // pred_check_branch
      %37 = sbr.rel (0) target = $region17
    $region16: #{tpu_custom_call.1} parent=1 // pred_region
      _
    $region17: #{tpu_custom_call.1} parent=1 // pred_fallthru
      _
    // Predicated region
    $region18: #{tpu_custom_call.1} parent=1 // pred_check
      _
    $region19: #{tpu_custom_call.1} parent=1 // pred_check_branch
      %39 = sbr.rel (0) target = $region21
    $region20: #{tpu_custom_call.1} parent=1 // pred_region
      _
    $region21: #{tpu_custom_call.1} parent=1 // pred_fallthru
      _
    // Predicated region
    $region22: #{tpu_custom_call.1} parent=1 // pred_check
      _
    $region23: #{tpu_custom_call.1} parent=1 // pred_check_branch
      %41 = sbr.rel (0) target = $region25
    $region24: #{tpu_custom_call.1} parent=1 // pred_region
      _
    $region25: #{tpu_custom_call.1} parent=1 // pred_fallthru
      _
    // Predicated region
    $region26: #{tpu_custom_call.1} parent=1 // pred_check
      _
    $region27: #{tpu_custom_call.1} parent=1 // pred_check_branch
      %43 = sbr.rel (0) target = $region29
    $region28: #{tpu_custom_call.1} parent=1 // pred_region
      _
    $region29: #{tpu_custom_call.1} parent=1 // pred_fallthru
      _
    // Predicated region
    $region30: #{tpu_custom_call.1} parent=1 // pred_check
      _
    $region31: #{tpu_custom_call.1} parent=1 // pred_check_branch
      %45 = sbr.rel (0) target = $region33
    $region32: #{tpu_custom_call.1} parent=1 // pred_region
      _
    $region33: #{tpu_custom_call.1} parent=1 // pred_fallthru
      _
    // Predicated region
    $region34: #{tpu_custom_call.1} parent=1 // pred_check
      _
    $region35: #{tpu_custom_call.1} parent=1 // pred_check_branch
      %47 = sbr.rel (0) target = $region37
    $region36: #{tpu_custom_call.1} parent=1 // pred_region
      _
    $region37: #{tpu_custom_call.1} parent=1 // pred_fallthru
      _
    // Predicated region
    $region38: #{tpu_custom_call.1} parent=1 // pred_check
      _
    $region39: #{tpu_custom_call.1} parent=1 // pred_check_branch
      %49 = sbr.rel (0) target = $region41
    $region40: #{tpu_custom_call.1} parent=1 // pred_region
      _
    $region41: #{tpu_custom_call.1} parent=1 // pred_fallthru
      _
    // Predicated region
    $region42: #{tpu_custom_call.1} parent=1 // pred_check
      _
    $region43: #{tpu_custom_call.1} parent=1 // pred_check_branch
      %51 = sbr.rel (0) target = $region45
    $region44: #{tpu_custom_call.1} parent=1 // pred_region
      _
    $region45: #{tpu_custom_call.1} parent=1 // pred_fallthru
      _
    // Predicated region
    $region46: #{tpu_custom_call.1} parent=1 // pred_check
      _
    $region47: #{tpu_custom_call.1} parent=1 // pred_check_branch
      %53 = sbr.rel (0) target = $region49
    $region48: #{tpu_custom_call.1} parent=1 // pred_region
      %55 = dma.done [#allocation4], 2048
    $region49: #{tpu_custom_call.1} parent=1 // pred_fallthru
      _
    %v56 = vld [vmem:[%s3] sm:$0x1]
    %s57 = sld [smem:[#allocation2]]
    %v58 = vld [vmem:[%s2] sm:$0x1]
    %v59 = vld [vmem:[%s5] sm:$0xf]
    %v60 = vld [vmem:[%s6] sm:$0xf]
    %v61 = vld [vmem:[%s7] sm:$0xf]
    %v62 = vld [vmem:[%s8] sm:$0xf]
    %v63 = vld [vmem:[%s9] sm:$0xff]
    %v64 = vld [vmem:[%s9 + $0x8] sm:$0xff]
    %v65 = vld [vmem:[%s9 + $0x10] sm:$0xff]
    %v66 = vld [vmem:[%s9 + $0x18] sm:$0xff]
    %v67 = vld [vmem:[%s10] sm:$0xff]
    %v68 = vld [vmem:[%s10 + $0x8] sm:$0xff]
    %v69 = vld [vmem:[%s10 + $0x10] sm:$0xff]
    %v70 = vld [vmem:[%s10 + $0x18] sm:$0xff]
    %v71 = vld [vmem:[#allocation3] sm:$0xff]
    %v72 = vld [vmem:[#allocation3 + $0x8] sm:$0xff]
    %v73 = vld [vmem:[#allocation3 + $0x10] sm:$0xff]
    %v74 = vld [vmem:[#allocation3 + $0x18] sm:$0xff]
    %v75 = vld [vmem:[#allocation3 + $0x20] sm:$0xff]
    %v76 = vld [vmem:[#allocation3 + $0x28] sm:$0xff]
    %v77 = vld [vmem:[#allocation3 + $0x30] sm:$0xff]
    %v78 = vld [vmem:[#allocation3 + $0x38] sm:$0xff]
    %v79 = vld [vmem:[%s1] sm:$0xff]
    %v80 = vld [vmem:[%s1 + $0x8] sm:$0xff]
    %v81 = vld [vmem:[%s1 + $0x10] sm:$0xff]
    %v82 = vld [vmem:[%s1 + $0x18] sm:$0xff]
    %v83 = vstv %s57
    %vm84 = vcmask 261120
    %v86 = vsel %vm84, %v56, 0
    %88 = vmatpush.msra.mxu0 0.0
    %89 = vmatpush.msra.mxu0 0.0
    %90 = vmatpush.msra.mxu0 0.0
    %91 = vmatpush.msra.mxu0 0.0
    %92 = vmatpush.msra.mxu0 0.0
    %93 = vmatpush.msra.mxu0 0.0
    %94 = vmatpush.msra.mxu0 0.0
    %95 = vmatpush.msra.mxu0 0.0
    %96 = vmatpush.msra.mxu0 0.0
    %97 = vmatpush.msra.mxu0 0.0
    %98 = vmatpush.msra.mxu0 0.0
    %99 = vmatpush.msra.mxu0 0.0
    %v100 = vand.u32 %v77, 4294901760
    %101 = vmatpush.msra.mxu0 %v100
    %v102 = vand.u32 %v75, 4294901760
    %103 = vmatpush.msra.mxu0 %v102
    %v104 = vand.u32 %v73, 4294901760
    %105 = vmatpush.msra.mxu0 %v104
    %v106 = vand.u32 %v71, 4294901760
    %107 = vmatpush.msra.mxu0 %v106
    %v108 = vand.u32 %v86, 4294901760
    %v109 = vsub.f32 %v86, %v108
    %v110 = vand.u32 %v109, 4294901760
    %v111 = vsub.f32 %v109, %v110
    %v112 = vand.u32 %v111, 4294901760
    %113 = vmatmul.f32.gmra.mxu0 %v112
    %v114 = vpop.f32.mrf.mxu0
    %v115 = vadd.f32 %v83, %v114
    %116 = vdwg.mxu0
    %117 = vmatpush.msra.mxu0 0.0
    %118 = vmatpush.msra.mxu0 0.0
    %119 = vmatpush.msra.mxu0 0.0
    %120 = vmatpush.msra.mxu0 0.0
    %121 = vmatpush.msra.mxu0 0.0
    %122 = vmatpush.msra.mxu0 0.0
    %123 = vmatpush.msra.mxu0 0.0
    %124 = vmatpush.msra.mxu0 0.0
    %125 = vmatpush.msra.mxu0 0.0
    %126 = vmatpush.msra.mxu0 0.0
    %127 = vmatpush.msra.mxu0 0.0
    %128 = vmatpush.msra.mxu0 0.0
    %v129 = vand.u32 %v77, 4294901760
    %v130 = vsub.f32 %v77, %v129
    %v131 = vand.u32 %v130, 4294901760
    %v132 = vsub.f32 %v130, %v131
    %v133 = vand.u32 %v132, 4294901760
    %134 = vmatpush.msra.mxu0 %v133
    %v135 = vand.u32 %v75, 4294901760
    %v136 = vsub.f32 %v75, %v135
    %v137 = vand.u32 %v136, 4294901760
    %v138 = vsub.f32 %v136, %v137
    %v139 = vand.u32 %v138, 4294901760
    %140 = vmatpush.msra.mxu0 %v139
    %v141 = vand.u32 %v73, 4294901760
    %v142 = vsub.f32 %v73, %v141
    %v143 = vand.u32 %v142, 4294901760
    %v144 = vsub.f32 %v142, %v143
    %v145 = vand.u32 %v144, 4294901760
    %146 = vmatpush.msra.mxu0 %v145
    %v147 = vand.u32 %v71, 4294901760
    %v148 = vsub.f32 %v71, %v147
    %v149 = vand.u32 %v148, 4294901760
    %v150 = vsub.f32 %v148, %v149
    %v151 = vand.u32 %v150, 4294901760
    %152 = vmatpush.msra.mxu0 %v151
    %v153 = vand.u32 %v86, 4294901760
    %154 = vmatmul.f32.gmra.mxu0 %v153
    %v155 = vpop.f32.mrf.mxu0
    %v156 = vadd.f32 %v115, %v155
    %157 = vdwg.mxu0
    %158 = vmatpush.msra.mxu0 0.0
    %159 = vmatpush.msra.mxu0 0.0
    %160 = vmatpush.msra.mxu0 0.0
    %161 = vmatpush.msra.mxu0 0.0
    %162 = vmatpush.msra.mxu0 0.0
    %163 = vmatpush.msra.mxu0 0.0
    %164 = vmatpush.msra.mxu0 0.0
    %165 = vmatpush.msra.mxu0 0.0
    %166 = vmatpush.msra.mxu0 0.0
    %167 = vmatpush.msra.mxu0 0.0
    %168 = vmatpush.msra.mxu0 0.0
    %169 = vmatpush.msra.mxu0 0.0
    %v170 = vand.u32 %v77, 4294901760
    %v171 = vsub.f32 %v77, %v170
    %172 = vmatpush.msra.mxu0 %v171
    %v173 = vand.u32 %v75, 4294901760
    %v174 = vsub.f32 %v75, %v173
    %175 = vmatpush.msra.mxu0 %v174
    %v176 = vand.u32 %v73, 4294901760
    %v177 = vsub.f32 %v73, %v176
    %178 = vmatpush.msra.mxu0 %v177
    %v179 = vand.u32 %v71, 4294901760
    %v180 = vsub.f32 %v71, %v179
    %181 = vmatpush.msra.mxu0 %v180
    %v182 = vand.u32 %v86, 4294901760
    %v183 = vsub.f32 %v86, %v182
    %184 = vmatmul.f32.gmra.mxu0 %v183
    %v185 = vpop.f32.mrf.mxu0
    %v186 = vadd.f32 %v156, %v185
    %187 = vdwg.mxu0
    %188 = vmatpush.msra.mxu0 0.0
    %189 = vmatpush.msra.mxu0 0.0
    %190 = vmatpush.msra.mxu0 0.0
    %191 = vmatpush.msra.mxu0 0.0
    %192 = vmatpush.msra.mxu0 0.0
    %193 = vmatpush.msra.mxu0 0.0
    %194 = vmatpush.msra.mxu0 0.0
    %195 = vmatpush.msra.mxu0 0.0
    %196 = vmatpush.msra.mxu0 0.0
    %197 = vmatpush.msra.mxu0 0.0
    %198 = vmatpush.msra.mxu0 0.0
    %199 = vmatpush.msra.mxu0 0.0
    %v200 = vand.u32 %v77, 4294901760
    %201 = vmatpush.msra.mxu0 %v200
    %v202 = vand.u32 %v75, 4294901760
    %203 = vmatpush.msra.mxu0 %v202
    %v204 = vand.u32 %v73, 4294901760
    %205 = vmatpush.msra.mxu0 %v204
    %v206 = vand.u32 %v71, 4294901760
    %207 = vmatpush.msra.mxu0 %v206
    %v208 = vand.u32 %v86, 4294901760
    %v209 = vsub.f32 %v86, %v208
    %v210 = vand.u32 %v209, 4294901760
    %211 = vmatmul.f32.gmra.mxu0 %v210
    %v212 = vpop.f32.mrf.mxu0
    %v213 = vadd.f32 %v186, %v212
    %214 = vdwg.mxu0
    %215 = vmatpush.msra.mxu0 0.0
    %216 = vmatpush.msra.mxu0 0.0
    %217 = vmatpush.msra.mxu0 0.0
    %218 = vmatpush.msra.mxu0 0.0
    %219 = vmatpush.msra.mxu0 0.0
    %220 = vmatpush.msra.mxu0 0.0
    %221 = vmatpush.msra.mxu0 0.0
    %222 = vmatpush.msra.mxu0 0.0
    %223 = vmatpush.msra.mxu0 0.0
    %224 = vmatpush.msra.mxu0 0.0
    %225 = vmatpush.msra.mxu0 0.0
    %226 = vmatpush.msra.mxu0 0.0
    %v227 = vand.u32 %v77, 4294901760
    %v228 = vsub.f32 %v77, %v227
    %v229 = vand.u32 %v228, 4294901760
    %230 = vmatpush.msra.mxu0 %v229
    %v231 = vand.u32 %v75, 4294901760
    %v232 = vsub.f32 %v75, %v231
    %v233 = vand.u32 %v232, 4294901760
    %234 = vmatpush.msra.mxu0 %v233
    %v235 = vand.u32 %v73, 4294901760
    %v236 = vsub.f32 %v73, %v235
    %v237 = vand.u32 %v236, 4294901760
    %238 = vmatpush.msra.mxu0 %v237
    %v239 = vand.u32 %v71, 4294901760
    %v240 = vsub.f32 %v71, %v239
    %v241 = vand.u32 %v240, 4294901760
    %242 = vmatpush.msra.mxu0 %v241
    %v243 = vand.u32 %v86, 4294901760
    %244 = vmatmul.f32.gmra.mxu0 %v243
    %v245 = vpop.f32.mrf.mxu0
    %v246 = vadd.f32 %v213, %v245
    %247 = vdwg.mxu0
    %248 = vmatpush.msra.mxu0 0.0
    %249 = vmatpush.msra.mxu0 0.0
    %250 = vmatpush.msra.mxu0 0.0
    %251 = vmatpush.msra.mxu0 0.0
    %252 = vmatpush.msra.mxu0 0.0
    %253 = vmatpush.msra.mxu0 0.0
    %254 = vmatpush.msra.mxu0 0.0
    %255 = vmatpush.msra.mxu0 0.0
    %256 = vmatpush.msra.mxu0 0.0
    %257 = vmatpush.msra.mxu0 0.0
    %258 = vmatpush.msra.mxu0 0.0
    %259 = vmatpush.msra.mxu0 0.0
    %v260 = vand.u32 %v77, 4294901760
    %261 = vmatpush.msra.mxu0 %v260
    %v262 = vand.u32 %v75, 4294901760
    %263 = vmatpush.msra.mxu0 %v262
    %v264 = vand.u32 %v73, 4294901760
    %265 = vmatpush.msra.mxu0 %v264
    %v266 = vand.u32 %v71, 4294901760
    %267 = vmatpush.msra.mxu0 %v266
    %v268 = vand.u32 %v86, 4294901760
    %269 = vmatmul.f32.gmra.mxu0 %v268
    %v270 = vpop.f32.mrf.mxu0
    %v271 = vadd.f32 %v246, %v270
    %272 = vdwg.mxu0
    %273 = vmatpush.msra.mxu0 0.0
    %274 = vmatpush.msra.mxu0 0.0
    %275 = vmatpush.msra.mxu0 0.0
    %276 = vmatpush.msra.mxu0 0.0
    %277 = vmatpush.msra.mxu0 0.0
    %278 = vmatpush.msra.mxu0 0.0
    %279 = vmatpush.msra.mxu0 0.0
    %280 = vmatpush.msra.mxu0 0.0
    %281 = vmatpush.msra.mxu0 0.0
    %282 = vmatpush.msra.mxu0 0.0
    %283 = vmatpush.msra.mxu0 0.0
    %284 = vmatpush.msra.mxu0 0.0
    %v285 = vand.u32 %v78, 4294901760
    %286 = vmatpush.msra.mxu0 %v285
    %v287 = vand.u32 %v76, 4294901760
    %288 = vmatpush.msra.mxu0 %v287
    %v289 = vand.u32 %v74, 4294901760
    %290 = vmatpush.msra.mxu0 %v289
    %v291 = vand.u32 %v72, 4294901760
    %292 = vmatpush.msra.mxu0 %v291
    %v293 = vand.u32 %v86, 4294901760
    %v294 = vsub.f32 %v86, %v293
    %v295 = vand.u32 %v294, 4294901760
    %v296 = vsub.f32 %v294, %v295
    %v297 = vand.u32 %v296, 4294901760
    %298 = vmatmul.f32.gmra.mxu0 %v297
    %v299 = vpop.f32.mrf.mxu0
    %v300 = vadd.f32 %v83, %v299
    %301 = vdwg.mxu0
    %302 = vmatpush.msra.mxu0 0.0
    %303 = vmatpush.msra.mxu0 0.0
    %304 = vmatpush.msra.mxu0 0.0
    %305 = vmatpush.msra.mxu0 0.0
    %306 = vmatpush.msra.mxu0 0.0
    %307 = vmatpush.msra.mxu0 0.0
    %308 = vmatpush.msra.mxu0 0.0
    %309 = vmatpush.msra.mxu0 0.0
    %310 = vmatpush.msra.mxu0 0.0
    %311 = vmatpush.msra.mxu0 0.0
    %312 = vmatpush.msra.mxu0 0.0
    %313 = vmatpush.msra.mxu0 0.0
    %v314 = vand.u32 %v78, 4294901760
    %v315 = vsub.f32 %v78, %v314
    %v316 = vand.u32 %v315, 4294901760
    %v317 = vsub.f32 %v315, %v316
    %v318 = vand.u32 %v317, 4294901760
    %319 = vmatpush.msra.mxu0 %v318
    %v320 = vand.u32 %v76, 4294901760
    %v321 = vsub.f32 %v76, %v320
    %v322 = vand.u32 %v321, 4294901760
    %v323 = vsub.f32 %v321, %v322
    %v324 = vand.u32 %v323, 4294901760
    %325 = vmatpush.msra.mxu0 %v324
    %v326 = vand.u32 %v74, 4294901760
    %v327 = vsub.f32 %v74, %v326
    %v328 = vand.u32 %v327, 4294901760
    %v329 = vsub.f32 %v327, %v328
    %v330 = vand.u32 %v329, 4294901760
    %331 = vmatpush.msra.mxu0 %v330
    %v332 = vand.u32 %v72, 4294901760
    %v333 = vsub.f32 %v72, %v332
    %v334 = vand.u32 %v333, 4294901760
    %v335 = vsub.f32 %v333, %v334
    %v336 = vand.u32 %v335, 4294901760
    %337 = vmatpush.msra.mxu0 %v336
    %v338 = vand.u32 %v86, 4294901760
    %339 = vmatmul.f32.gmra.mxu0 %v338
    %v340 = vpop.f32.mrf.mxu0
    %v341 = vadd.f32 %v300, %v340
    %342 = vdwg.mxu0
    %343 = vmatpush.msra.mxu0 0.0
    %344 = vmatpush.msra.mxu0 0.0
    %345 = vmatpush.msra.mxu0 0.0
    %346 = vmatpush.msra.mxu0 0.0
    %347 = vmatpush.msra.mxu0 0.0
    %348 = vmatpush.msra.mxu0 0.0
    %349 = vmatpush.msra.mxu0 0.0
    %350 = vmatpush.msra.mxu0 0.0
    %351 = vmatpush.msra.mxu0 0.0
    %352 = vmatpush.msra.mxu0 0.0
    %353 = vmatpush.msra.mxu0 0.0
    %354 = vmatpush.msra.mxu0 0.0
    %v355 = vand.u32 %v78, 4294901760
    %v356 = vsub.f32 %v78, %v355
    %357 = vmatpush.msra.mxu0 %v356
    %v358 = vand.u32 %v76, 4294901760
    %v359 = vsub.f32 %v76, %v358
    %360 = vmatpush.msra.mxu0 %v359
    %v361 = vand.u32 %v74, 4294901760
    %v362 = vsub.f32 %v74, %v361
    %363 = vmatpush.msra.mxu0 %v362
    %v364 = vand.u32 %v72, 4294901760
    %v365 = vsub.f32 %v72, %v364
    %366 = vmatpush.msra.mxu0 %v365
    %v367 = vand.u32 %v86, 4294901760
    %v368 = vsub.f32 %v86, %v367
    %369 = vmatmul.f32.gmra.mxu0 %v368
    %v370 = vpop.f32.mrf.mxu0
    %v371 = vadd.f32 %v341, %v370
    %372 = vdwg.mxu0
    %373 = vmatpush.msra.mxu0 0.0
    %374 = vmatpush.msra.mxu0 0.0
    %375 = vmatpush.msra.mxu0 0.0
    %376 = vmatpush.msra.mxu0 0.0
    %377 = vmatpush.msra.mxu0 0.0
    %378 = vmatpush.msra.mxu0 0.0
    %379 = vmatpush.msra.mxu0 0.0
    %380 = vmatpush.msra.mxu0 0.0
    %381 = vmatpush.msra.mxu0 0.0
    %382 = vmatpush.msra.mxu0 0.0
    %383 = vmatpush.msra.mxu0 0.0
    %384 = vmatpush.msra.mxu0 0.0
    %v385 = vand.u32 %v78, 4294901760
    %386 = vmatpush.msra.mxu0 %v385
    %v387 = vand.u32 %v76, 4294901760
    %388 = vmatpush.msra.mxu0 %v387
    %v389 = vand.u32 %v74, 4294901760
    %390 = vmatpush.msra.mxu0 %v389
    %v391 = vand.u32 %v72, 4294901760
    %392 = vmatpush.msra.mxu0 %v391
    %v393 = vand.u32 %v86, 4294901760
    %v394 = vsub.f32 %v86, %v393
    %v395 = vand.u32 %v394, 4294901760
    %396 = vmatmul.f32.gmra.mxu0 %v395
    %v397 = vpop.f32.mrf.mxu0
    %v398 = vadd.f32 %v371, %v397
    %399 = vdwg.mxu0
    %400 = vmatpush.msra.mxu0 0.0
    %401 = vmatpush.msra.mxu0 0.0
    %402 = vmatpush.msra.mxu0 0.0
    %403 = vmatpush.msra.mxu0 0.0
    %404 = vmatpush.msra.mxu0 0.0
    %405 = vmatpush.msra.mxu0 0.0
    %406 = vmatpush.msra.mxu0 0.0
    %407 = vmatpush.msra.mxu0 0.0
    %408 = vmatpush.msra.mxu0 0.0
    %409 = vmatpush.msra.mxu0 0.0
    %410 = vmatpush.msra.mxu0 0.0
    %411 = vmatpush.msra.mxu0 0.0
    %v412 = vand.u32 %v78, 4294901760
    %v413 = vsub.f32 %v78, %v412
    %v414 = vand.u32 %v413, 4294901760
    %415 = vmatpush.msra.mxu0 %v414
    %v416 = vand.u32 %v76, 4294901760
    %v417 = vsub.f32 %v76, %v416
    %v418 = vand.u32 %v417, 4294901760
    %419 = vmatpush.msra.mxu0 %v418
    %v420 = vand.u32 %v74, 4294901760
    %v421 = vsub.f32 %v74, %v420
    %v422 = vand.u32 %v421, 4294901760
    %423 = vmatpush.msra.mxu0 %v422
    %v424 = vand.u32 %v72, 4294901760
    %v425 = vsub.f32 %v72, %v424
    %v426 = vand.u32 %v425, 4294901760
    %427 = vmatpush.msra.mxu0 %v426
    %v428 = vand.u32 %v86, 4294901760
    %429 = vmatmul.f32.gmra.mxu0 %v428
    %v430 = vpop.f32.mrf.mxu0
    %v431 = vadd.f32 %v398, %v430
    %432 = vdwg.mxu0
    %433 = vmatpush.msra.mxu0 0.0
    %434 = vmatpush.msra.mxu0 0.0
    %435 = vmatpush.msra.mxu0 0.0
    %436 = vmatpush.msra.mxu0 0.0
    %437 = vmatpush.msra.mxu0 0.0
    %438 = vmatpush.msra.mxu0 0.0
    %439 = vmatpush.msra.mxu0 0.0
    %440 = vmatpush.msra.mxu0 0.0
    %441 = vmatpush.msra.mxu0 0.0
    %442 = vmatpush.msra.mxu0 0.0
    %443 = vmatpush.msra.mxu0 0.0
    %444 = vmatpush.msra.mxu0 0.0
    %v445 = vand.u32 %v78, 4294901760
    %446 = vmatpush.msra.mxu0 %v445
    %v447 = vand.u32 %v76, 4294901760
    %448 = vmatpush.msra.mxu0 %v447
    %v449 = vand.u32 %v74, 4294901760
    %450 = vmatpush.msra.mxu0 %v449
    %v451 = vand.u32 %v72, 4294901760
    %452 = vmatpush.msra.mxu0 %v451
    %v453 = vand.u32 %v86, 4294901760
    %454 = vmatmul.f32.gmra.mxu0 %v453
    %v455 = vpop.f32.mrf.mxu0
    %v456 = vadd.f32 %v431, %v455
    %457 = vdwg.mxu0
    %458 = vmatpush.msra.mxu0 0.0
    %459 = vmatpush.msra.mxu0 0.0
    %460 = vmatpush.msra.mxu0 0.0
    %461 = vmatpush.msra.mxu0 0.0
    %462 = vmatpush.msra.mxu0 0.0
    %463 = vmatpush.msra.mxu0 0.0
    %464 = vmatpush.msra.mxu0 0.0
    %465 = vmatpush.msra.mxu0 0.0
    %466 = vmatpush.msra.mxu0 0.0
    %467 = vmatpush.msra.mxu0 0.0
    %468 = vmatpush.msra.mxu0 0.0
    %469 = vmatpush.msra.mxu0 0.0
    %v470 = vand.u32 %v82, 4294901760
    %471 = vmatpush.msra.mxu0 %v470
    %v472 = vand.u32 %v81, 4294901760
    %473 = vmatpush.msra.mxu0 %v472
    %v474 = vand.u32 %v80, 4294901760
    %475 = vmatpush.msra.mxu0 %v474
    %v476 = vand.u32 %v79, 4294901760
    %477 = vmatpush.msra.mxu0 %v476
    %v478 = vand.u32 %v86, 4294901760
    %v479 = vsub.f32 %v86, %v478
    %v480 = vand.u32 %v479, 4294901760
    %v481 = vsub.f32 %v479, %v480
    %v482 = vand.u32 %v481, 4294901760
    %483 = vmatmul.f32.gmra.mxu0 %v482
    %v484 = vpop.f32.mrf.mxu0
    %v485 = vadd.f32 %v83, %v484
    %486 = vdwg.mxu0
    %487 = vmatpush.msra.mxu0 0.0
    %488 = vmatpush.msra.mxu0 0.0
    %489 = vmatpush.msra.mxu0 0.0
    %490 = vmatpush.msra.mxu0 0.0
    %491 = vmatpush.msra.mxu0 0.0
    %492 = vmatpush.msra.mxu0 0.0
    %493 = vmatpush.msra.mxu0 0.0
    %494 = vmatpush.msra.mxu0 0.0
    %495 = vmatpush.msra.mxu0 0.0
    %496 = vmatpush.msra.mxu0 0.0
    %497 = vmatpush.msra.mxu0 0.0
    %498 = vmatpush.msra.mxu0 0.0
    %v499 = vand.u32 %v82, 4294901760
    %v500 = vsub.f32 %v82, %v499
    %v501 = vand.u32 %v500, 4294901760
    %v502 = vsub.f32 %v500, %v501
    %v503 = vand.u32 %v502, 4294901760
    %504 = vmatpush.msra.mxu0 %v503
    %v505 = vand.u32 %v81, 4294901760
    %v506 = vsub.f32 %v81, %v505
    %v507 = vand.u32 %v506, 4294901760
    %v508 = vsub.f32 %v506, %v507
    %v509 = vand.u32 %v508, 4294901760
    %510 = vmatpush.msra.mxu0 %v509
    %v511 = vand.u32 %v80, 4294901760
    %v512 = vsub.f32 %v80, %v511
    %v513 = vand.u32 %v512, 4294901760
    %v514 = vsub.f32 %v512, %v513
    %v515 = vand.u32 %v514, 4294901760
    %516 = vmatpush.msra.mxu0 %v515
    %v517 = vand.u32 %v79, 4294901760
    %v518 = vsub.f32 %v79, %v517
    %v519 = vand.u32 %v518, 4294901760
    %v520 = vsub.f32 %v518, %v519
    %v521 = vand.u32 %v520, 4294901760
    %522 = vmatpush.msra.mxu0 %v521
    %v523 = vand.u32 %v86, 4294901760
    %524 = vmatmul.f32.gmra.mxu0 %v523
    %v525 = vpop.f32.mrf.mxu0
    %v526 = vadd.f32 %v485, %v525
    %527 = vdwg.mxu0
    %528 = vmatpush.msra.mxu0 0.0
    %529 = vmatpush.msra.mxu0 0.0
    %530 = vmatpush.msra.mxu0 0.0
    %531 = vmatpush.msra.mxu0 0.0
    %532 = vmatpush.msra.mxu0 0.0
    %533 = vmatpush.msra.mxu0 0.0
    %534 = vmatpush.msra.mxu0 0.0
    %535 = vmatpush.msra.mxu0 0.0
    %536 = vmatpush.msra.mxu0 0.0
    %537 = vmatpush.msra.mxu0 0.0
    %538 = vmatpush.msra.mxu0 0.0
    %539 = vmatpush.msra.mxu0 0.0
    %v540 = vand.u32 %v82, 4294901760
    %v541 = vsub.f32 %v82, %v540
    %542 = vmatpush.msra.mxu0 %v541
    %v543 = vand.u32 %v81, 4294901760
    %v544 = vsub.f32 %v81, %v543
    %545 = vmatpush.msra.mxu0 %v544
    %v546 = vand.u32 %v80, 4294901760
    %v547 = vsub.f32 %v80, %v546
    %548 = vmatpush.msra.mxu0 %v547
    %v549 = vand.u32 %v79, 4294901760
    %v550 = vsub.f32 %v79, %v549
    %551 = vmatpush.msra.mxu0 %v550
    %v552 = vand.u32 %v86, 4294901760
    %v553 = vsub.f32 %v86, %v552
    %554 = vmatmul.f32.gmra.mxu0 %v553
    %v555 = vpop.f32.mrf.mxu0
    %v556 = vadd.f32 %v526, %v555
    %557 = vdwg.mxu0
    %558 = vmatpush.msra.mxu0 0.0
    %559 = vmatpush.msra.mxu0 0.0
    %560 = vmatpush.msra.mxu0 0.0
    %561 = vmatpush.msra.mxu0 0.0
    %562 = vmatpush.msra.mxu0 0.0
    %563 = vmatpush.msra.mxu0 0.0
    %564 = vmatpush.msra.mxu0 0.0
    %565 = vmatpush.msra.mxu0 0.0
    %566 = vmatpush.msra.mxu0 0.0
    %567 = vmatpush.msra.mxu0 0.0
    %568 = vmatpush.msra.mxu0 0.0
    %569 = vmatpush.msra.mxu0 0.0
    %v570 = vand.u32 %v82, 4294901760
    %571 = vmatpush.msra.mxu0 %v570
    %v572 = vand.u32 %v81, 4294901760
    %573 = vmatpush.msra.mxu0 %v572
    %v574 = vand.u32 %v80, 4294901760
    %575 = vmatpush.msra.mxu0 %v574
    %v576 = vand.u32 %v79, 4294901760
    %577 = vmatpush.msra.mxu0 %v576
    %v578 = vand.u32 %v86, 4294901760
    %v579 = vsub.f32 %v86, %v578
    %v580 = vand.u32 %v579, 4294901760
    %581 = vmatmul.f32.gmra.mxu0 %v580
    %v582 = vpop.f32.mrf.mxu0
    %v583 = vadd.f32 %v556, %v582
    %584 = vdwg.mxu0
    %585 = vmatpush.msra.mxu0 0.0
    %586 = vmatpush.msra.mxu0 0.0
    %587 = vmatpush.msra.mxu0 0.0
    %588 = vmatpush.msra.mxu0 0.0
    %589 = vmatpush.msra.mxu0 0.0
    %590 = vmatpush.msra.mxu0 0.0
    %591 = vmatpush.msra.mxu0 0.0
    %592 = vmatpush.msra.mxu0 0.0
    %593 = vmatpush.msra.mxu0 0.0
    %594 = vmatpush.msra.mxu0 0.0
    %595 = vmatpush.msra.mxu0 0.0
    %596 = vmatpush.msra.mxu0 0.0
    %v597 = vand.u32 %v82, 4294901760
    %v598 = vsub.f32 %v82, %v597
    %v599 = vand.u32 %v598, 4294901760
    %600 = vmatpush.msra.mxu0 %v599
    %v601 = vand.u32 %v81, 4294901760
    %v602 = vsub.f32 %v81, %v601
    %v603 = vand.u32 %v602, 4294901760
    %604 = vmatpush.msra.mxu0 %v603
    %v605 = vand.u32 %v80, 4294901760
    %v606 = vsub.f32 %v80, %v605
    %v607 = vand.u32 %v606, 4294901760
    %608 = vmatpush.msra.mxu0 %v607
    %v609 = vand.u32 %v79, 4294901760
    %v610 = vsub.f32 %v79, %v609
    %v611 = vand.u32 %v610, 4294901760
    %612 = vmatpush.msra.mxu0 %v611
    %v613 = vand.u32 %v86, 4294901760
    %614 = vmatmul.f32.gmra.mxu0 %v613
    %v615 = vpop.f32.mrf.mxu0
    %v616 = vadd.f32 %v583, %v615
    %617 = vdwg.mxu0
    %618 = vmatpush.msra.mxu0 0.0
    %619 = vmatpush.msra.mxu0 0.0
    %620 = vmatpush.msra.mxu0 0.0
    %621 = vmatpush.msra.mxu0 0.0
    %622 = vmatpush.msra.mxu0 0.0
    %623 = vmatpush.msra.mxu0 0.0
    %624 = vmatpush.msra.mxu0 0.0
    %625 = vmatpush.msra.mxu0 0.0
    %626 = vmatpush.msra.mxu0 0.0
    %627 = vmatpush.msra.mxu0 0.0
    %628 = vmatpush.msra.mxu0 0.0
    %629 = vmatpush.msra.mxu0 0.0
    %v630 = vand.u32 %v82, 4294901760
    %631 = vmatpush.msra.mxu0 %v630
    %v632 = vand.u32 %v81, 4294901760
    %633 = vmatpush.msra.mxu0 %v632
    %v634 = vand.u32 %v80, 4294901760
    %635 = vmatpush.msra.mxu0 %v634
    %v636 = vand.u32 %v79, 4294901760
    %637 = vmatpush.msra.mxu0 %v636
    %v638 = vand.u32 %v86, 4294901760
    %639 = vmatmul.f32.gmra.mxu0 %v638
    %v640 = vpop.f32.mrf.mxu0
    %v641 = vadd.f32 %v616, %v640
    %642 = vdwg.mxu0
    %v643 = vmul.f32 %v641, %v58
    %vm644 = vcmask 1040384
    %v645 = vsel %vm644, %v271, -inf
    %vm646 = vcmask 548864
    %v647 = vsel %vm646, %v456, -inf
    %v648 = vmax.f32 %v645, %v647
    %649 = vmax.xlane.f32.xlu0 %v648
    %v650 = vpop.xlane.xlu0 %649
    %vm651 = vcmask 466944
    %v652 = vsel %vm651, %v643, -inf
    %653 = vmax.xlane.f32.xlu0 %v652
    %v654 = vpop.xlane.xlu0 %653
    %v655 = vmax.f32 %v650, %v654
    %v656 = vsub.f32 %v271, %v655
    %v657 = vsub.f32 %v456, %v655
    %v658 = vmul.f32 %v656, 1.442695
    %v659 = vpow.pop %v658
    %v660 = vmul.f32 %v657, 1.442695
    %v661 = vpow.pop %v660
    %v662 = vsub.f32 %v643, %v655
    %v663 = vmul.f32 %v662, 1.442695
    %v664 = vpow.pop %v663
    %v665 = vsel %vm644, %v659, 0.0
    %v666 = vsel %vm646, %v661, 0.0
    %v667 = vadd.f32 %v665, %v666
    %668 = vadd.xlane.f32.xlu0 %v667
    %v669 = vpop.xlane.xlu0 %668
    %v670 = vsel %vm651, %v664, 0.0
    %671 = vadd.xlane.f32.xlu0 %v670
    %v672 = vpop.xlane.xlu0 %671
    %v673 = vadd.f32 %v669, %v672
    %v674 = vrcp.pop %v673
    %v675 = vmul.f32 %v673, %v674
    %v676 = vsub.f32 2.0, %v675
    %v677 = vmul.f32 %v674, %v676
    %v678 = vperm.slane %v664, 0
    %v679 = vmul.f32 %v79, %v678
    %v680 = vmul.f32 %v80, %v678
    %v681 = vmul.f32 %v81, %v678
    %v682 = vmul.f32 %v82, %v678
    %vm683 = vcmask 474112
    %v684 = vsel %vm683, %v679, 0.0
    %685 = vadd.xlane.f32.xlu0 %v684
    %v686 = vpop.xlane.xlu0 %685
    %v687 = vsel %vm683, %v680, 0.0
    %688 = vadd.xlane.f32.xlu0 %v687
    %v689 = vpop.xlane.xlu0 %688
    %v690 = vsel %vm683, %v681, 0.0
    %691 = vadd.xlane.f32.xlu0 %v690
    %v692 = vpop.xlane.xlu0 %691
    %v693 = vsel %vm683, %v682, 0.0
    %694 = vadd.xlane.f32.xlu0 %v693
    %v695 = vpop.xlane.xlu0 %694
    %v696 = vperm.slane %v659, 0
    %v697 = vperm.slane %v661, 0
    %v698 = vmul.f32 %v71, %v696
    %v699 = vmul.f32 %v72, %v697
    %v700 = vmul.f32 %v73, %v696
    %v701 = vmul.f32 %v74, %v697
    %v702 = vmul.f32 %v75, %v696
    %v703 = vmul.f32 %v76, %v697
    %v704 = vmul.f32 %v77, %v696
    %v705 = vmul.f32 %v78, %v697
    %vm706 = vcmask 556032
    %v707 = vsel %vm706, %v699, 0.0
    %v708 = vadd.f32 %v698, %v707
    %709 = vadd.xlane.f32.xlu0 %v708
    %v710 = vpop.xlane.xlu0 %709
    %v711 = vadd.f32 %v710, %v686
    %v712 = vsel %vm706, %v701, 0.0
    %v713 = vadd.f32 %v700, %v712
    %714 = vadd.xlane.f32.xlu0 %v713
    %v715 = vpop.xlane.xlu0 %714
    %v716 = vadd.f32 %v715, %v689
    %v717 = vsel %vm706, %v703, 0.0
    %v718 = vadd.f32 %v702, %v717
    %719 = vadd.xlane.f32.xlu0 %v718
    %v720 = vpop.xlane.xlu0 %719
    %v721 = vadd.f32 %v720, %v692
    %v722 = vsel %vm706, %v705, 0.0
    %v723 = vadd.f32 %v704, %v722
    %724 = vadd.xlane.f32.xlu0 %v723
    %v725 = vpop.xlane.xlu0 %724
    %v726 = vadd.f32 %v725, %v695
    %v727 = vperm.slane %v677, 0
    %v728 = vmul.f32 %v711, %v727
    %v729 = vmul.f32 %v716, %v727
    %v730 = vmul.f32 %v721, %v727
    %v731 = vmul.f32 %v726, %v727
    %v733 = vsel %vm84, %v59, 0
    %735 = vmatpush.msra.mxu0 0.0
    %736 = vmatpush.msra.mxu0 0.0
    %737 = vmatpush.msra.mxu0 0.0
    %738 = vmatpush.msra.mxu0 0.0
    %739 = vmatpush.msra.mxu0 0.0
    %740 = vmatpush.msra.mxu0 0.0
    %741 = vmatpush.msra.mxu0 0.0
    %742 = vmatpush.msra.mxu0 0.0
    %743 = vmatpush.msra.mxu0 0.0
    %744 = vmatpush.msra.mxu0 0.0
    %745 = vmatpush.msra.mxu0 0.0
    %746 = vmatpush.msra.mxu0 0.0
    %v747 = vand.u32 %v731, 4294901760
    %748 = vmatpush.msra.mxu0 %v747
    %v749 = vand.u32 %v730, 4294901760
    %750 = vmatpush.msra.mxu0 %v749
    %v751 = vand.u32 %v729, 4294901760
    %752 = vmatpush.msra.mxu0 %v751
    %v753 = vand.u32 %v728, 4294901760
    %754 = vmatpush.msra.mxu0 %v753
    %v755 = vand.u32 %v733, 4294901760
    %v756 = vsub.f32 %v733, %v755
    %v757 = vand.u32 %v756, 4294901760
    %v758 = vsub.f32 %v756, %v757
    %v759 = vand.u32 %v758, 4294901760
    %760 = vmatmul.f32.gmra.mxu0 %v759
    %v761 = vpop.f32.mrf.mxu0
    %v762 = vadd.f32 %v60, %v761
    %763 = vdwg.mxu0
    %764 = vmatpush.msra.mxu0 0.0
    %765 = vmatpush.msra.mxu0 0.0
    %766 = vmatpush.msra.mxu0 0.0
    %767 = vmatpush.msra.mxu0 0.0
    %768 = vmatpush.msra.mxu0 0.0
    %769 = vmatpush.msra.mxu0 0.0
    %770 = vmatpush.msra.mxu0 0.0
    %771 = vmatpush.msra.mxu0 0.0
    %772 = vmatpush.msra.mxu0 0.0
    %773 = vmatpush.msra.mxu0 0.0
    %774 = vmatpush.msra.mxu0 0.0
    %775 = vmatpush.msra.mxu0 0.0
    %v776 = vand.u32 %v731, 4294901760
    %v777 = vsub.f32 %v731, %v776
    %v778 = vand.u32 %v777, 4294901760
    %v779 = vsub.f32 %v777, %v778
    %v780 = vand.u32 %v779, 4294901760
    %781 = vmatpush.msra.mxu0 %v780
    %v782 = vand.u32 %v730, 4294901760
    %v783 = vsub.f32 %v730, %v782
    %v784 = vand.u32 %v783, 4294901760
    %v785 = vsub.f32 %v783, %v784
    %v786 = vand.u32 %v785, 4294901760
    %787 = vmatpush.msra.mxu0 %v786
    %v788 = vand.u32 %v729, 4294901760
    %v789 = vsub.f32 %v729, %v788
    %v790 = vand.u32 %v789, 4294901760
    %v791 = vsub.f32 %v789, %v790
    %v792 = vand.u32 %v791, 4294901760
    %793 = vmatpush.msra.mxu0 %v792
    %v794 = vand.u32 %v728, 4294901760
    %v795 = vsub.f32 %v728, %v794
    %v796 = vand.u32 %v795, 4294901760
    %v797 = vsub.f32 %v795, %v796
    %v798 = vand.u32 %v797, 4294901760
    %799 = vmatpush.msra.mxu0 %v798
    %v800 = vand.u32 %v733, 4294901760
    %801 = vmatmul.f32.gmra.mxu0 %v800
    %v802 = vpop.f32.mrf.mxu0
    %v803 = vadd.f32 %v762, %v802
    %804 = vdwg.mxu0
    %805 = vmatpush.msra.mxu0 0.0
    %806 = vmatpush.msra.mxu0 0.0
    %807 = vmatpush.msra.mxu0 0.0
    %808 = vmatpush.msra.mxu0 0.0
    %809 = vmatpush.msra.mxu0 0.0
    %810 = vmatpush.msra.mxu0 0.0
    %811 = vmatpush.msra.mxu0 0.0
    %812 = vmatpush.msra.mxu0 0.0
    %813 = vmatpush.msra.mxu0 0.0
    %814 = vmatpush.msra.mxu0 0.0
    %815 = vmatpush.msra.mxu0 0.0
    %816 = vmatpush.msra.mxu0 0.0
    %v817 = vand.u32 %v731, 4294901760
    %v818 = vsub.f32 %v731, %v817
    %819 = vmatpush.msra.mxu0 %v818
    %v820 = vand.u32 %v730, 4294901760
    %v821 = vsub.f32 %v730, %v820
    %822 = vmatpush.msra.mxu0 %v821
    %v823 = vand.u32 %v729, 4294901760
    %v824 = vsub.f32 %v729, %v823
    %825 = vmatpush.msra.mxu0 %v824
    %v826 = vand.u32 %v728, 4294901760
    %v827 = vsub.f32 %v728, %v826
    %828 = vmatpush.msra.mxu0 %v827
    %v829 = vand.u32 %v733, 4294901760
    %v830 = vsub.f32 %v733, %v829
    %831 = vmatmul.f32.gmra.mxu0 %v830
    %v832 = vpop.f32.mrf.mxu0
    %v833 = vadd.f32 %v803, %v832
    %834 = vdwg.mxu0
    %835 = vmatpush.msra.mxu0 0.0
    %836 = vmatpush.msra.mxu0 0.0
    %837 = vmatpush.msra.mxu0 0.0
    %838 = vmatpush.msra.mxu0 0.0
    %839 = vmatpush.msra.mxu0 0.0
    %840 = vmatpush.msra.mxu0 0.0
    %841 = vmatpush.msra.mxu0 0.0
    %842 = vmatpush.msra.mxu0 0.0
    %843 = vmatpush.msra.mxu0 0.0
    %844 = vmatpush.msra.mxu0 0.0
    %845 = vmatpush.msra.mxu0 0.0
    %846 = vmatpush.msra.mxu0 0.0
    %v847 = vand.u32 %v731, 4294901760
    %848 = vmatpush.msra.mxu0 %v847
    %v849 = vand.u32 %v730, 4294901760
    %850 = vmatpush.msra.mxu0 %v849
    %v851 = vand.u32 %v729, 4294901760
    %852 = vmatpush.msra.mxu0 %v851
    %v853 = vand.u32 %v728, 4294901760
    %854 = vmatpush.msra.mxu0 %v853
    %v855 = vand.u32 %v733, 4294901760
    %v856 = vsub.f32 %v733, %v855
    %v857 = vand.u32 %v856, 4294901760
    %858 = vmatmul.f32.gmra.mxu0 %v857
    %v859 = vpop.f32.mrf.mxu0
    %v860 = vadd.f32 %v833, %v859
    %861 = vdwg.mxu0
    %862 = vmatpush.msra.mxu0 0.0
    %863 = vmatpush.msra.mxu0 0.0
    %864 = vmatpush.msra.mxu0 0.0
    %865 = vmatpush.msra.mxu0 0.0
    %866 = vmatpush.msra.mxu0 0.0
    %867 = vmatpush.msra.mxu0 0.0
    %868 = vmatpush.msra.mxu0 0.0
    %869 = vmatpush.msra.mxu0 0.0
    %870 = vmatpush.msra.mxu0 0.0
    %871 = vmatpush.msra.mxu0 0.0
    %872 = vmatpush.msra.mxu0 0.0
    %873 = vmatpush.msra.mxu0 0.0
    %v874 = vand.u32 %v731, 4294901760
    %v875 = vsub.f32 %v731, %v874
    %v876 = vand.u32 %v875, 4294901760
    %877 = vmatpush.msra.mxu0 %v876
    %v878 = vand.u32 %v730, 4294901760
    %v879 = vsub.f32 %v730, %v878
    %v880 = vand.u32 %v879, 4294901760
    %881 = vmatpush.msra.mxu0 %v880
    %v882 = vand.u32 %v729, 4294901760
    %v883 = vsub.f32 %v729, %v882
    %v884 = vand.u32 %v883, 4294901760
    %885 = vmatpush.msra.mxu0 %v884
    %v886 = vand.u32 %v728, 4294901760
    %v887 = vsub.f32 %v728, %v886
    %v888 = vand.u32 %v887, 4294901760
    %889 = vmatpush.msra.mxu0 %v888
    %v890 = vand.u32 %v733, 4294901760
    %891 = vmatmul.f32.gmra.mxu0 %v890
    %v892 = vpop.f32.mrf.mxu0
    %v893 = vadd.f32 %v860, %v892
    %894 = vdwg.mxu0
    %895 = vmatpush.msra.mxu0 0.0
    %896 = vmatpush.msra.mxu0 0.0
    %897 = vmatpush.msra.mxu0 0.0
    %898 = vmatpush.msra.mxu0 0.0
    %899 = vmatpush.msra.mxu0 0.0
    %900 = vmatpush.msra.mxu0 0.0
    %901 = vmatpush.msra.mxu0 0.0
    %902 = vmatpush.msra.mxu0 0.0
    %903 = vmatpush.msra.mxu0 0.0
    %904 = vmatpush.msra.mxu0 0.0
    %905 = vmatpush.msra.mxu0 0.0
    %906 = vmatpush.msra.mxu0 0.0
    %v907 = vand.u32 %v731, 4294901760
    %908 = vmatpush.msra.mxu0 %v907
    %v909 = vand.u32 %v730, 4294901760
    %910 = vmatpush.msra.mxu0 %v909
    %v911 = vand.u32 %v729, 4294901760
    %912 = vmatpush.msra.mxu0 %v911
    %v913 = vand.u32 %v728, 4294901760
    %914 = vmatpush.msra.mxu0 %v913
    %v915 = vand.u32 %v733, 4294901760
    %916 = vmatmul.f32.gmra.mxu0 %v915
    %v917 = vpop.f32.mrf.mxu0
    %v918 = vadd.f32 %v893, %v917
    %919 = vdwg.mxu0
    %vm920 = vcmask 3072
    %v921 = vsel %vm920, %v918, 0.0
    %v922 = vrot.slane %v921, 4
    %v923 = vadd.f32 %v921, %v922
    %v924 = vrot.slane %v923, 2
    %v925 = vadd.f32 %v923, %v924
    %v926 = vrot.slane %v925, 1
    %v927 = vadd.f32 %v925, %v926
    %v928 = vrcp.pop 4.0
    %v929 = vmul.f32 4.0, %v928
    %v930 = vsub.f32 1.0, %v929
    %v931 = vmul.f32 %v928, %v930
    %v932 = vadd.f32 %v928, %v931
    %vm933 = vweird.f32 %v928
    %v934 = vsel %vm933, %v928, %v932
    %v935 = vmul.f32 %v927, %v934
    %v936 = vsub.f32 %v918, %v935
    %v937 = vmul.f32 %v936, %v936
    %v938 = vsel %vm920, %v937, 0.0
    %v939 = vrot.slane %v938, 4
    %v940 = vadd.f32 %v938, %v939
    %v941 = vrot.slane %v940, 2
    %v942 = vadd.f32 %v940, %v941
    %v943 = vrot.slane %v942, 1
    %v944 = vadd.f32 %v942, %v943
    %v945 = vmul.f32 %v944, %v934
    %v946 = vadd.f32 %v945, 1e-05
    %v947 = vrsqrt.pop %v946
    %v948 = vmul.f32 %v947, %v946
    %v949 = vmul.f32 %v948, %v947
    %v950 = vmul.f32 0.5, %v949
    %v951 = vsub.f32 1.5, %v950
    %v952 = vmul.f32 %v947, %v951
    %vm953 = vweird.f32 %v946
    %vm954 = vweird.f32 %v947
    %vm955 = vmor %vm953, %vm954
    %v956 = vsel %vm955, %v947, %v952
    %v957 = vmul.f32 %v936, %v956
    %v958 = vmul.f32 %v957, %v61
    %v959 = vadd.f32 %v958, %v62
    %v960 = vmax.f32 %v959, 0.0
    %vm961 = vcmask 31744
    %v963 = vsel %vm961, %v63, 0
    %v966 = vsel %vm961, %v64, 0
    %v969 = vsel %vm961, %v65, 0
    %v972 = vsel %vm961, %v66, 0
    %vm974 = vcmask 1043456
    %v976 = vsel %vm974, %v960, 0
    %978 = vmatpush.msra.mxu0 0.0
    %979 = vmatpush.msra.mxu0 0.0
    %980 = vmatpush.msra.mxu0 0.0
    %981 = vmatpush.msra.mxu0 0.0
    %982 = vmatpush.msra.mxu0 0.0
    %983 = vmatpush.msra.mxu0 0.0
    %984 = vmatpush.msra.mxu0 0.0
    %985 = vmatpush.msra.mxu0 0.0
    %986 = vmatpush.msra.mxu0 0.0
    %987 = vmatpush.msra.mxu0 0.0
    %988 = vmatpush.msra.mxu0 0.0
    %989 = vmatpush.msra.mxu0 0.0
    %990 = vmatpush.msra.mxu0 0.0
    %991 = vmatpush.msra.mxu0 0.0
    %992 = vmatpush.msra.mxu0 0.0
    %v993 = vand.u32 %v976, 4294901760
    %994 = vmatpush.msra.mxu0 %v993
    %v995 = vand.u32 %v963, 4294901760
    %v996 = vsub.f32 %v963, %v995
    %v997 = vand.u32 %v996, 4294901760
    %v998 = vsub.f32 %v996, %v997
    %v999 = vand.u32 %v998, 4294901760
    %1000 = vmatmul.f32.gmra.mxu0 %v999
    %v1001 = vpop.f32.mrf.mxu0
    %v1002 = vadd.f32 %v67, %v1001
    %v1003 = vand.u32 %v966, 4294901760
    %v1004 = vsub.f32 %v966, %v1003
    %v1005 = vand.u32 %v1004, 4294901760
    %v1006 = vsub.f32 %v1004, %v1005
    %v1007 = vand.u32 %v1006, 4294901760
    %1008 = vmatmul.f32.gmra.mxu0 %v1007
    %v1009 = vpop.f32.mrf.mxu0
    %v1010 = vadd.f32 %v68, %v1009
    %v1011 = vand.u32 %v969, 4294901760
    %v1012 = vsub.f32 %v969, %v1011
    %v1013 = vand.u32 %v1012, 4294901760
    %v1014 = vsub.f32 %v1012, %v1013
    %v1015 = vand.u32 %v1014, 4294901760
    %1016 = vmatmul.f32.gmra.mxu0 %v1015
    %v1017 = vpop.f32.mrf.mxu0
    %v1018 = vadd.f32 %v69, %v1017
    %v1019 = vand.u32 %v972, 4294901760
    %v1020 = vsub.f32 %v972, %v1019
    %v1021 = vand.u32 %v1020, 4294901760
    %v1022 = vsub.f32 %v1020, %v1021
    %v1023 = vand.u32 %v1022, 4294901760
    %1024 = vmatmul.f32.gmra.mxu0 %v1023
    %v1025 = vpop.f32.mrf.mxu0
    %v1026 = vadd.f32 %v70, %v1025
    %1027 = vdwg.mxu0
    %1028 = vmatpush.msra.mxu0 0.0
    %1029 = vmatpush.msra.mxu0 0.0
    %1030 = vmatpush.msra.mxu0 0.0
    %1031 = vmatpush.msra.mxu0 0.0
    %1032 = vmatpush.msra.mxu0 0.0
    %1033 = vmatpush.msra.mxu0 0.0
    %1034 = vmatpush.msra.mxu0 0.0
    %1035 = vmatpush.msra.mxu0 0.0
    %1036 = vmatpush.msra.mxu0 0.0
    %1037 = vmatpush.msra.mxu0 0.0
    %1038 = vmatpush.msra.mxu0 0.0
    %1039 = vmatpush.msra.mxu0 0.0
    %1040 = vmatpush.msra.mxu0 0.0
    %1041 = vmatpush.msra.mxu0 0.0
    %1042 = vmatpush.msra.mxu0 0.0
    %v1043 = vand.u32 %v976, 4294901760
    %v1044 = vsub.f32 %v976, %v1043
    %v1045 = vand.u32 %v1044, 4294901760
    %v1046 = vsub.f32 %v1044, %v1045
    %v1047 = vand.u32 %v1046, 4294901760
    %1048 = vmatpush.msra.mxu0 %v1047
    %v1049 = vand.u32 %v963, 4294901760
    %1050 = vmatmul.f32.gmra.mxu0 %v1049
    %v1051 = vpop.f32.mrf.mxu0
    %v1052 = vadd.f32 %v1002, %v1051
    %v1053 = vand.u32 %v966, 4294901760
    %1054 = vmatmul.f32.gmra.mxu0 %v1053
    %v1055 = vpop.f32.mrf.mxu0
    %v1056 = vadd.f32 %v1010, %v1055
    %v1057 = vand.u32 %v969, 4294901760
    %1058 = vmatmul.f32.gmra.mxu0 %v1057
    %v1059 = vpop.f32.mrf.mxu0
    %v1060 = vadd.f32 %v1018, %v1059
    %v1061 = vand.u32 %v972, 4294901760
    %1062 = vmatmul.f32.gmra.mxu0 %v1061
    %v1063 = vpop.f32.mrf.mxu0
    %v1064 = vadd.f32 %v1026, %v1063
    %1065 = vdwg.mxu0
    %1066 = vmatpush.msra.mxu0 0.0
    %1067 = vmatpush.msra.mxu0 0.0
    %1068 = vmatpush.msra.mxu0 0.0
    %1069 = vmatpush.msra.mxu0 0.0
    %1070 = vmatpush.msra.mxu0 0.0
    %1071 = vmatpush.msra.mxu0 0.0
    %1072 = vmatpush.msra.mxu0 0.0
    %1073 = vmatpush.msra.mxu0 0.0
    %1074 = vmatpush.msra.mxu0 0.0
    %1075 = vmatpush.msra.mxu0 0.0
    %1076 = vmatpush.msra.mxu0 0.0
    %1077 = vmatpush.msra.mxu0 0.0
    %1078 = vmatpush.msra.mxu0 0.0
    %1079 = vmatpush.msra.mxu0 0.0
    %1080 = vmatpush.msra.mxu0 0.0
    %v1081 = vand.u32 %v976, 4294901760
    %v1082 = vsub.f32 %v976, %v1081
    %1083 = vmatpush.msra.mxu0 %v1082
    %v1084 = vand.u32 %v963, 4294901760
    %v1085 = vsub.f32 %v963, %v1084
    %1086 = vmatmul.f32.gmra.mxu0 %v1085
    %v1087 = vpop.f32.mrf.mxu0
    %v1088 = vadd.f32 %v1052, %v1087
    %v1089 = vand.u32 %v966, 4294901760
    %v1090 = vsub.f32 %v966, %v1089
    %1091 = vmatmul.f32.gmra.mxu0 %v1090
    %v1092 = vpop.f32.mrf.mxu0
    %v1093 = vadd.f32 %v1056, %v1092
    %v1094 = vand.u32 %v969, 4294901760
    %v1095 = vsub.f32 %v969, %v1094
    %1096 = vmatmul.f32.gmra.mxu0 %v1095
    %v1097 = vpop.f32.mrf.mxu0
    %v1098 = vadd.f32 %v1060, %v1097
    %v1099 = vand.u32 %v972, 4294901760
    %v1100 = vsub.f32 %v972, %v1099
    %1101 = vmatmul.f32.gmra.mxu0 %v1100
    %v1102 = vpop.f32.mrf.mxu0
    %v1103 = vadd.f32 %v1064, %v1102
    %1104 = vdwg.mxu0
    %1105 = vmatpush.msra.mxu0 0.0
    %1106 = vmatpush.msra.mxu0 0.0
    %1107 = vmatpush.msra.mxu0 0.0
    %1108 = vmatpush.msra.mxu0 0.0
    %1109 = vmatpush.msra.mxu0 0.0
    %1110 = vmatpush.msra.mxu0 0.0
    %1111 = vmatpush.msra.mxu0 0.0
    %1112 = vmatpush.msra.mxu0 0.0
    %1113 = vmatpush.msra.mxu0 0.0
    %1114 = vmatpush.msra.mxu0 0.0
    %1115 = vmatpush.msra.mxu0 0.0
    %1116 = vmatpush.msra.mxu0 0.0
    %1117 = vmatpush.msra.mxu0 0.0
    %1118 = vmatpush.msra.mxu0 0.0
    %1119 = vmatpush.msra.mxu0 0.0
    %v1120 = vand.u32 %v976, 4294901760
    %1121 = vmatpush.msra.mxu0 %v1120
    %v1122 = vand.u32 %v963, 4294901760
    %v1123 = vsub.f32 %v963, %v1122
    %v1124 = vand.u32 %v1123, 4294901760
    %1125 = vmatmul.f32.gmra.mxu0 %v1124
    %v1126 = vpop.f32.mrf.mxu0
    %v1127 = vadd.f32 %v1088, %v1126
    %v1128 = vand.u32 %v966, 4294901760
    %v1129 = vsub.f32 %v966, %v1128
    %v1130 = vand.u32 %v1129, 4294901760
    %1131 = vmatmul.f32.gmra.mxu0 %v1130
    %v1132 = vpop.f32.mrf.mxu0
    %v1133 = vadd.f32 %v1093, %v1132
    %v1134 = vand.u32 %v969, 4294901760
    %v1135 = vsub.f32 %v969, %v1134
    %v1136 = vand.u32 %v1135, 4294901760
    %1137 = vmatmul.f32.gmra.mxu0 %v1136
    %v1138 = vpop.f32.mrf.mxu0
    %v1139 = vadd.f32 %v1098, %v1138
    %v1140 = vand.u32 %v972, 4294901760
    %v1141 = vsub.f32 %v972, %v1140
    %v1142 = vand.u32 %v1141, 4294901760
    %1143 = vmatmul.f32.gmra.mxu0 %v1142
    %v1144 = vpop.f32.mrf.mxu0
    %v1145 = vadd.f32 %v1103, %v1144
    %1146 = vdwg.mxu0
    %1147 = vmatpush.msra.mxu0 0.0
    %1148 = vmatpush.msra.mxu0 0.0
    %1149 = vmatpush.msra.mxu0 0.0
    %1150 = vmatpush.msra.mxu0 0.0
    %1151 = vmatpush.msra.mxu0 0.0
    %1152 = vmatpush.msra.mxu0 0.0
    %1153 = vmatpush.msra.mxu0 0.0
    %1154 = vmatpush.msra.mxu0 0.0
    %1155 = vmatpush.msra.mxu0 0.0
    %1156 = vmatpush.msra.mxu0 0.0
    %1157 = vmatpush.msra.mxu0 0.0
    %1158 = vmatpush.msra.mxu0 0.0
    %1159 = vmatpush.msra.mxu0 0.0
    %1160 = vmatpush.msra.mxu0 0.0
    %1161 = vmatpush.msra.mxu0 0.0
    %v1162 = vand.u32 %v976, 4294901760
    %v1163 = vsub.f32 %v976, %v1162
    %v1164 = vand.u32 %v1163, 4294901760
    %1165 = vmatpush.msra.mxu0 %v1164
    %v1166 = vand.u32 %v963, 4294901760
    %1167 = vmatmul.f32.gmra.mxu0 %v1166
    %v1168 = vpop.f32.mrf.mxu0
    %v1169 = vadd.f32 %v1127, %v1168
    %v1170 = vand.u32 %v966, 4294901760
    %1171 = vmatmul.f32.gmra.mxu0 %v1170
    %v1172 = vpop.f32.mrf.mxu0
    %v1173 = vadd.f32 %v1133, %v1172
    %v1174 = vand.u32 %v969, 4294901760
    %1175 = vmatmul.f32.gmra.mxu0 %v1174
    %v1176 = vpop.f32.mrf.mxu0
    %v1177 = vadd.f32 %v1139, %v1176
    %v1178 = vand.u32 %v972, 4294901760
    %1179 = vmatmul.f32.gmra.mxu0 %v1178
    %v1180 = vpop.f32.mrf.mxu0
    %v1181 = vadd.f32 %v1145, %v1180
    %1182 = vdwg.mxu0
    %1183 = vmatpush.msra.mxu0 0.0
    %1184 = vmatpush.msra.mxu0 0.0
    %1185 = vmatpush.msra.mxu0 0.0
    %1186 = vmatpush.msra.mxu0 0.0
    %1187 = vmatpush.msra.mxu0 0.0
    %1188 = vmatpush.msra.mxu0 0.0
    %1189 = vmatpush.msra.mxu0 0.0
    %1190 = vmatpush.msra.mxu0 0.0
    %1191 = vmatpush.msra.mxu0 0.0
    %1192 = vmatpush.msra.mxu0 0.0
    %1193 = vmatpush.msra.mxu0 0.0
    %1194 = vmatpush.msra.mxu0 0.0
    %1195 = vmatpush.msra.mxu0 0.0
    %1196 = vmatpush.msra.mxu0 0.0
    %1197 = vmatpush.msra.mxu0 0.0
    %v1198 = vand.u32 %v976, 4294901760
    %1199 = vmatpush.msra.mxu0 %v1198
    %v1200 = vand.u32 %v963, 4294901760
    %1201 = vmatmul.f32.gmra.mxu0 %v1200
    %v1202 = vpop.f32.mrf.mxu0
    %v1203 = vadd.f32 %v1169, %v1202
    %v1204 = vand.u32 %v966, 4294901760
    %1205 = vmatmul.f32.gmra.mxu0 %v1204
    %v1206 = vpop.f32.mrf.mxu0
    %v1207 = vadd.f32 %v1173, %v1206
    %v1208 = vand.u32 %v969, 4294901760
    %1209 = vmatmul.f32.gmra.mxu0 %v1208
    %v1210 = vpop.f32.mrf.mxu0
    %v1211 = vadd.f32 %v1177, %v1210
    %v1212 = vand.u32 %v972, 4294901760
    %1213 = vmatmul.f32.gmra.mxu0 %v1212
    %v1214 = vpop.f32.mrf.mxu0
    %v1215 = vadd.f32 %v1181, %v1214
    %1216 = vdwg.mxu0
    %1218 = vset.pattern.permute.xlu0 0
    %1219 = vperm.xlu0 %1218, %v1203
    %v1220 = vpop.permute.xlu0 %1219
    %1223 = vset.pattern.permute.xlu0 0
    %1224 = vperm.xlu0 %1223, %v1207
    %v1225 = vpop.permute.xlu0 %1224
    %1228 = vset.pattern.permute.xlu0 0
    %1229 = vperm.xlu0 %1228, %v1211
    %v1230 = vpop.permute.xlu0 %1229
    %1233 = vset.pattern.permute.xlu0 0
    %1234 = vperm.xlu0 %1233, %v1215
    %v1235 = vpop.permute.xlu0 %1234
    %v1237 = vadd.f32 %v71, %v1220
    %v1238 = vadd.f32 %v72, %v1220
    %v1239 = vadd.f32 %v73, %v1225
    %v1240 = vadd.f32 %v74, %v1225
    %v1241 = vadd.f32 %v75, %v1230
    %v1242 = vadd.f32 %v76, %v1230
    %v1243 = vadd.f32 %v77, %v1235
    %v1244 = vadd.f32 %v78, %v1235
    %1245 = vst [vmem:[#allocation6] sm:$0xff] %v1237
    %1246 = vst.msk [vmem:[#allocation6 + $0x8] sm:$0xff] %vm706, %v1238
    %1247 = vst [vmem:[#allocation6 + $0x10] sm:$0xff] %v1239
    %1248 = vst.msk [vmem:[#allocation6 + $0x18] sm:$0xff] %vm706, %v1240
    %1249 = vst [vmem:[#allocation6 + $0x20] sm:$0xff] %v1241
    %1250 = vst.msk [vmem:[#allocation6 + $0x28] sm:$0xff] %vm706, %v1242
    %1251 = vst [vmem:[#allocation6 + $0x30] sm:$0xff] %v1243
    %1252 = vst.msk [vmem:[#allocation6 + $0x38] sm:$0xff] %vm706, %v1244
    %s1253 = scalar_lea.vmem [#allocation3], 64
    %v1254 = vld [vmem:[%s1253] sm:$0xff]
    %v1255 = vld [vmem:[%s1253 + $0x8] sm:$0xff]
    %v1256 = vld [vmem:[%s1253 + $0x10] sm:$0xff]
    %v1257 = vld [vmem:[%s1253 + $0x18] sm:$0xff]
    %v1258 = vld [vmem:[%s1253 + $0x20] sm:$0xff]
    %v1259 = vld [vmem:[%s1253 + $0x28] sm:$0xff]
    %v1260 = vld [vmem:[%s1253 + $0x30] sm:$0xff]
    %v1261 = vld [vmem:[%s1253 + $0x38] sm:$0xff]
    %s1262 = scalar_lea.vmem %s1, 32
    %v1263 = vld [vmem:[%s1262] sm:$0xff]
    %v1264 = vld [vmem:[%s1262 + $0x8] sm:$0xff]
    %v1265 = vld [vmem:[%s1262 + $0x10] sm:$0xff]
    %v1266 = vld [vmem:[%s1262 + $0x18] sm:$0xff]
    %1267 = vmatpush.msra.mxu0 0.0
    %1268 = vmatpush.msra.mxu0 0.0
    %1269 = vmatpush.msra.mxu0 0.0
    %1270 = vmatpush.msra.mxu0 0.0
    %1271 = vmatpush.msra.mxu0 0.0
    %1272 = vmatpush.msra.mxu0 0.0
    %1273 = vmatpush.msra.mxu0 0.0
    %1274 = vmatpush.msra.mxu0 0.0
    %1275 = vmatpush.msra.mxu0 0.0
    %1276 = vmatpush.msra.mxu0 0.0
    %1277 = vmatpush.msra.mxu0 0.0
    %1278 = vmatpush.msra.mxu0 0.0
    %v1279 = vand.u32 %v1260, 4294901760
    %1280 = vmatpush.msra.mxu0 %v1279
    %v1281 = vand.u32 %v1258, 4294901760
    %1282 = vmatpush.msra.mxu0 %v1281
    %v1283 = vand.u32 %v1256, 4294901760
    %1284 = vmatpush.msra.mxu0 %v1283
    %v1285 = vand.u32 %v1254, 4294901760
    %1286 = vmatpush.msra.mxu0 %v1285
    %v1287 = vand.u32 %v86, 4294901760
    %v1288 = vsub.f32 %v86, %v1287
    %v1289 = vand.u32 %v1288, 4294901760
    %v1290 = vsub.f32 %v1288, %v1289
    %v1291 = vand.u32 %v1290, 4294901760
    %1292 = vmatmul.f32.gmra.mxu0 %v1291
    %v1293 = vpop.f32.mrf.mxu0
    %v1294 = vadd.f32 %v83, %v1293
    %1295 = vdwg.mxu0
    %1296 = vmatpush.msra.mxu0 0.0
    %1297 = vmatpush.msra.mxu0 0.0
    %1298 = vmatpush.msra.mxu0 0.0
    %1299 = vmatpush.msra.mxu0 0.0
    %1300 = vmatpush.msra.mxu0 0.0
    %1301 = vmatpush.msra.mxu0 0.0
    %1302 = vmatpush.msra.mxu0 0.0
    %1303 = vmatpush.msra.mxu0 0.0
    %1304 = vmatpush.msra.mxu0 0.0
    %1305 = vmatpush.msra.mxu0 0.0
    %1306 = vmatpush.msra.mxu0 0.0
    %1307 = vmatpush.msra.mxu0 0.0
    %v1308 = vand.u32 %v1260, 4294901760
    %v1309 = vsub.f32 %v1260, %v1308
    %v1310 = vand.u32 %v1309, 4294901760
    %v1311 = vsub.f32 %v1309, %v1310
    %v1312 = vand.u32 %v1311, 4294901760
    %1313 = vmatpush.msra.mxu0 %v1312
    %v1314 = vand.u32 %v1258, 4294901760
    %v1315 = vsub.f32 %v1258, %v1314
    %v1316 = vand.u32 %v1315, 4294901760
    %v1317 = vsub.f32 %v1315, %v1316
    %v1318 = vand.u32 %v1317, 4294901760
    %1319 = vmatpush.msra.mxu0 %v1318
    %v1320 = vand.u32 %v1256, 4294901760
    %v1321 = vsub.f32 %v1256, %v1320
    %v1322 = vand.u32 %v1321, 4294901760
    %v1323 = vsub.f32 %v1321, %v1322
    %v1324 = vand.u32 %v1323, 4294901760
    %1325 = vmatpush.msra.mxu0 %v1324
    %v1326 = vand.u32 %v1254, 4294901760
    %v1327 = vsub.f32 %v1254, %v1326
    %v1328 = vand.u32 %v1327, 4294901760
    %v1329 = vsub.f32 %v1327, %v1328
    %v1330 = vand.u32 %v1329, 4294901760
    %1331 = vmatpush.msra.mxu0 %v1330
    %v1332 = vand.u32 %v86, 4294901760
    %1333 = vmatmul.f32.gmra.mxu0 %v1332
    %v1334 = vpop.f32.mrf.mxu0
    %v1335 = vadd.f32 %v1294, %v1334
    %1336 = vdwg.mxu0
    %1337 = vmatpush.msra.mxu0 0.0
    %1338 = vmatpush.msra.mxu0 0.0
    %1339 = vmatpush.msra.mxu0 0.0
    %1340 = vmatpush.msra.mxu0 0.0
    %1341 = vmatpush.msra.mxu0 0.0
    %1342 = vmatpush.msra.mxu0 0.0
    %1343 = vmatpush.msra.mxu0 0.0
    %1344 = vmatpush.msra.mxu0 0.0
    %1345 = vmatpush.msra.mxu0 0.0
    %1346 = vmatpush.msra.mxu0 0.0
    %1347 = vmatpush.msra.mxu0 0.0
    %1348 = vmatpush.msra.mxu0 0.0
    %v1349 = vand.u32 %v1260, 4294901760
    %v1350 = vsub.f32 %v1260, %v1349
    %1351 = vmatpush.msra.mxu0 %v1350
    %v1352 = vand.u32 %v1258, 4294901760
    %v1353 = vsub.f32 %v1258, %v1352
    %1354 = vmatpush.msra.mxu0 %v1353
    %v1355 = vand.u32 %v1256, 4294901760
    %v1356 = vsub.f32 %v1256, %v1355
    %1357 = vmatpush.msra.mxu0 %v1356
    %v1358 = vand.u32 %v1254, 4294901760
    %v1359 = vsub.f32 %v1254, %v1358
    %1360 = vmatpush.msra.mxu0 %v1359
    %v1361 = vand.u32 %v86, 4294901760
    %v1362 = vsub.f32 %v86, %v1361
    %1363 = vmatmul.f32.gmra.mxu0 %v1362
    %v1364 = vpop.f32.mrf.mxu0
    %v1365 = vadd.f32 %v1335, %v1364
    %1366 = vdwg.mxu0
    %1367 = vmatpush.msra.mxu0 0.0
    %1368 = vmatpush.msra.mxu0 0.0
    %1369 = vmatpush.msra.mxu0 0.0
    %1370 = vmatpush.msra.mxu0 0.0
    %1371 = vmatpush.msra.mxu0 0.0
    %1372 = vmatpush.msra.mxu0 0.0
    %1373 = vmatpush.msra.mxu0 0.0
    %1374 = vmatpush.msra.mxu0 0.0
    %1375 = vmatpush.msra.mxu0 0.0
    %1376 = vmatpush.msra.mxu0 0.0
    %1377 = vmatpush.msra.mxu0 0.0
    %1378 = vmatpush.msra.mxu0 0.0
    %v1379 = vand.u32 %v1260, 4294901760
    %1380 = vmatpush.msra.mxu0 %v1379
    %v1381 = vand.u32 %v1258, 4294901760
    %1382 = vmatpush.msra.mxu0 %v1381
    %v1383 = vand.u32 %v1256, 4294901760
    %1384 = vmatpush.msra.mxu0 %v1383
    %v1385 = vand.u32 %v1254, 4294901760
    %1386 = vmatpush.msra.mxu0 %v1385
    %v1387 = vand.u32 %v86, 4294901760
    %v1388 = vsub.f32 %v86, %v1387
    %v1389 = vand.u32 %v1388, 4294901760
    %1390 = vmatmul.f32.gmra.mxu0 %v1389
    %v1391 = vpop.f32.mrf.mxu0
    %v1392 = vadd.f32 %v1365, %v1391
    %1393 = vdwg.mxu0
    %1394 = vmatpush.msra.mxu0 0.0
    %1395 = vmatpush.msra.mxu0 0.0
    %1396 = vmatpush.msra.mxu0 0.0
    %1397 = vmatpush.msra.mxu0 0.0
    %1398 = vmatpush.msra.mxu0 0.0
    %1399 = vmatpush.msra.mxu0 0.0
    %1400 = vmatpush.msra.mxu0 0.0
    %1401 = vmatpush.msra.mxu0 0.0
    %1402 = vmatpush.msra.mxu0 0.0
    %1403 = vmatpush.msra.mxu0 0.0
    %1404 = vmatpush.msra.mxu0 0.0
    %1405 = vmatpush.msra.mxu0 0.0
    %v1406 = vand.u32 %v1260, 4294901760
    %v1407 = vsub.f32 %v1260, %v1406
    %v1408 = vand.u32 %v1407, 4294901760
    %1409 = vmatpush.msra.mxu0 %v1408
    %v1410 = vand.u32 %v1258, 4294901760
    %v1411 = vsub.f32 %v1258, %v1410
    %v1412 = vand.u32 %v1411, 4294901760
    %1413 = vmatpush.msra.mxu0 %v1412
    %v1414 = vand.u32 %v1256, 4294901760
    %v1415 = vsub.f32 %v1256, %v1414
    %v1416 = vand.u32 %v1415, 4294901760
    %1417 = vmatpush.msra.mxu0 %v1416
    %v1418 = vand.u32 %v1254, 4294901760
    %v1419 = vsub.f32 %v1254, %v1418
    %v1420 = vand.u32 %v1419, 4294901760
    %1421 = vmatpush.msra.mxu0 %v1420
    %v1422 = vand.u32 %v86, 4294901760
    %1423 = vmatmul.f32.gmra.mxu0 %v1422
    %v1424 = vpop.f32.mrf.mxu0
    %v1425 = vadd.f32 %v1392, %v1424
    %1426 = vdwg.mxu0
    %1427 = vmatpush.msra.mxu0 0.0
    %1428 = vmatpush.msra.mxu0 0.0
    %1429 = vmatpush.msra.mxu0 0.0
    %1430 = vmatpush.msra.mxu0 0.0
    %1431 = vmatpush.msra.mxu0 0.0
    %1432 = vmatpush.msra.mxu0 0.0
    %1433 = vmatpush.msra.mxu0 0.0
    %1434 = vmatpush.msra.mxu0 0.0
    %1435 = vmatpush.msra.mxu0 0.0
    %1436 = vmatpush.msra.mxu0 0.0
    %1437 = vmatpush.msra.mxu0 0.0
    %1438 = vmatpush.msra.mxu0 0.0
    %v1439 = vand.u32 %v1260, 4294901760
    %1440 = vmatpush.msra.mxu0 %v1439
    %v1441 = vand.u32 %v1258, 4294901760
    %1442 = vmatpush.msra.mxu0 %v1441
    %v1443 = vand.u32 %v1256, 4294901760
    %1444 = vmatpush.msra.mxu0 %v1443
    %v1445 = vand.u32 %v1254, 4294901760
    %1446 = vmatpush.msra.mxu0 %v1445
    %v1447 = vand.u32 %v86, 4294901760
    %1448 = vmatmul.f32.gmra.mxu0 %v1447
    %v1449 = vpop.f32.mrf.mxu0
    %v1450 = vadd.f32 %v1425, %v1449
    %1451 = vdwg.mxu0
    %1452 = vmatpush.msra.mxu0 0.0
    %1453 = vmatpush.msra.mxu0 0.0
    %1454 = vmatpush.msra.mxu0 0.0
    %1455 = vmatpush.msra.mxu0 0.0
    %1456 = vmatpush.msra.mxu0 0.0
    %1457 = vmatpush.msra.mxu0 0.0
    %1458 = vmatpush.msra.mxu0 0.0
    %1459 = vmatpush.msra.mxu0 0.0
    %1460 = vmatpush.msra.mxu0 0.0
    %1461 = vmatpush.msra.mxu0 0.0
    %1462 = vmatpush.msra.mxu0 0.0
    %1463 = vmatpush.msra.mxu0 0.0
    %v1464 = vand.u32 %v1261, 4294901760
    %1465 = vmatpush.msra.mxu0 %v1464
    %v1466 = vand.u32 %v1259, 4294901760
    %1467 = vmatpush.msra.mxu0 %v1466
    %v1468 = vand.u32 %v1257, 4294901760
    %1469 = vmatpush.msra.mxu0 %v1468
    %v1470 = vand.u32 %v1255, 4294901760
    %1471 = vmatpush.msra.mxu0 %v1470
    %v1472 = vand.u32 %v86, 4294901760
    %v1473 = vsub.f32 %v86, %v1472
    %v1474 = vand.u32 %v1473, 4294901760
    %v1475 = vsub.f32 %v1473, %v1474
    %v1476 = vand.u32 %v1475, 4294901760
    %1477 = vmatmul.f32.gmra.mxu0 %v1476
    %v1478 = vpop.f32.mrf.mxu0
    %v1479 = vadd.f32 %v83, %v1478
    %1480 = vdwg.mxu0
    %1481 = vmatpush.msra.mxu0 0.0
    %1482 = vmatpush.msra.mxu0 0.0
    %1483 = vmatpush.msra.mxu0 0.0
    %1484 = vmatpush.msra.mxu0 0.0
    %1485 = vmatpush.msra.mxu0 0.0
    %1486 = vmatpush.msra.mxu0 0.0
    %1487 = vmatpush.msra.mxu0 0.0
    %1488 = vmatpush.msra.mxu0 0.0
    %1489 = vmatpush.msra.mxu0 0.0
    %1490 = vmatpush.msra.mxu0 0.0
    %1491 = vmatpush.msra.mxu0 0.0
    %1492 = vmatpush.msra.mxu0 0.0
    %v1493 = vand.u32 %v1261, 4294901760
    %v1494 = vsub.f32 %v1261, %v1493
    %v1495 = vand.u32 %v1494, 4294901760
    %v1496 = vsub.f32 %v1494, %v1495
    %v1497 = vand.u32 %v1496, 4294901760
    %1498 = vmatpush.msra.mxu0 %v1497
    %v1499 = vand.u32 %v1259, 4294901760
    %v1500 = vsub.f32 %v1259, %v1499
    %v1501 = vand.u32 %v1500, 4294901760
    %v1502 = vsub.f32 %v1500, %v1501
    %v1503 = vand.u32 %v1502, 4294901760
    %1504 = vmatpush.msra.mxu0 %v1503
    %v1505 = vand.u32 %v1257, 4294901760
    %v1506 = vsub.f32 %v1257, %v1505
    %v1507 = vand.u32 %v1506, 4294901760
    %v1508 = vsub.f32 %v1506, %v1507
    %v1509 = vand.u32 %v1508, 4294901760
    %1510 = vmatpush.msra.mxu0 %v1509
    %v1511 = vand.u32 %v1255, 4294901760
    %v1512 = vsub.f32 %v1255, %v1511
    %v1513 = vand.u32 %v1512, 4294901760
    %v1514 = vsub.f32 %v1512, %v1513
    %v1515 = vand.u32 %v1514, 4294901760
    %1516 = vmatpush.msra.mxu0 %v1515
    %v1517 = vand.u32 %v86, 4294901760
    %1518 = vmatmul.f32.gmra.mxu0 %v1517
    %v1519 = vpop.f32.mrf.mxu0
    %v1520 = vadd.f32 %v1479, %v1519
    %1521 = vdwg.mxu0
    %1522 = vmatpush.msra.mxu0 0.0
    %1523 = vmatpush.msra.mxu0 0.0
    %1524 = vmatpush.msra.mxu0 0.0
    %1525 = vmatpush.msra.mxu0 0.0
    %1526 = vmatpush.msra.mxu0 0.0
    %1527 = vmatpush.msra.mxu0 0.0
    %1528 = vmatpush.msra.mxu0 0.0
    %1529 = vmatpush.msra.mxu0 0.0
    %1530 = vmatpush.msra.mxu0 0.0
    %1531 = vmatpush.msra.mxu0 0.0
    %1532 = vmatpush.msra.mxu0 0.0
    %1533 = vmatpush.msra.mxu0 0.0
    %v1534 = vand.u32 %v1261, 4294901760
    %v1535 = vsub.f32 %v1261, %v1534
    %1536 = vmatpush.msra.mxu0 %v1535
    %v1537 = vand.u32 %v1259, 4294901760
    %v1538 = vsub.f32 %v1259, %v1537
    %1539 = vmatpush.msra.mxu0 %v1538
    %v1540 = vand.u32 %v1257, 4294901760
    %v1541 = vsub.f32 %v1257, %v1540
    %1542 = vmatpush.msra.mxu0 %v1541
    %v1543 = vand.u32 %v1255, 4294901760
    %v1544 = vsub.f32 %v1255, %v1543
    %1545 = vmatpush.msra.mxu0 %v1544
    %v1546 = vand.u32 %v86, 4294901760
    %v1547 = vsub.f32 %v86, %v1546
    %1548 = vmatmul.f32.gmra.mxu0 %v1547
    %v1549 = vpop.f32.mrf.mxu0
    %v1550 = vadd.f32 %v1520, %v1549
    %1551 = vdwg.mxu0
    %1552 = vmatpush.msra.mxu0 0.0
    %1553 = vmatpush.msra.mxu0 0.0
    %1554 = vmatpush.msra.mxu0 0.0
    %1555 = vmatpush.msra.mxu0 0.0
    %1556 = vmatpush.msra.mxu0 0.0
    %1557 = vmatpush.msra.mxu0 0.0
    %1558 = vmatpush.msra.mxu0 0.0
    %1559 = vmatpush.msra.mxu0 0.0
    %1560 = vmatpush.msra.mxu0 0.0
    %1561 = vmatpush.msra.mxu0 0.0
    %1562 = vmatpush.msra.mxu0 0.0
    %1563 = vmatpush.msra.mxu0 0.0
    %v1564 = vand.u32 %v1261, 4294901760
    %1565 = vmatpush.msra.mxu0 %v1564
    %v1566 = vand.u32 %v1259, 4294901760
    %1567 = vmatpush.msra.mxu0 %v1566
    %v1568 = vand.u32 %v1257, 4294901760
    %1569 = vmatpush.msra.mxu0 %v1568
    %v1570 = vand.u32 %v1255, 4294901760
    %1571 = vmatpush.msra.mxu0 %v1570
    %v1572 = vand.u32 %v86, 4294901760
    %v1573 = vsub.f32 %v86, %v1572
    %v1574 = vand.u32 %v1573, 4294901760
    %1575 = vmatmul.f32.gmra.mxu0 %v1574
    %v1576 = vpop.f32.mrf.mxu0
    %v1577 = vadd.f32 %v1550, %v1576
    %1578 = vdwg.mxu0
    %1579 = vmatpush.msra.mxu0 0.0
    %1580 = vmatpush.msra.mxu0 0.0
    %1581 = vmatpush.msra.mxu0 0.0
    %1582 = vmatpush.msra.mxu0 0.0
    %1583 = vmatpush.msra.mxu0 0.0
    %1584 = vmatpush.msra.mxu0 0.0
    %1585 = vmatpush.msra.mxu0 0.0
    %1586 = vmatpush.msra.mxu0 0.0
    %1587 = vmatpush.msra.mxu0 0.0
    %1588 = vmatpush.msra.mxu0 0.0
    %1589 = vmatpush.msra.mxu0 0.0
    %1590 = vmatpush.msra.mxu0 0.0
    %v1591 = vand.u32 %v1261, 4294901760
    %v1592 = vsub.f32 %v1261, %v1591
    %v1593 = vand.u32 %v1592, 4294901760
    %1594 = vmatpush.msra.mxu0 %v1593
    %v1595 = vand.u32 %v1259, 4294901760
    %v1596 = vsub.f32 %v1259, %v1595
    %v1597 = vand.u32 %v1596, 4294901760
    %1598 = vmatpush.msra.mxu0 %v1597
    %v1599 = vand.u32 %v1257, 4294901760
    %v1600 = vsub.f32 %v1257, %v1599
    %v1601 = vand.u32 %v1600, 4294901760
    %1602 = vmatpush.msra.mxu0 %v1601
    %v1603 = vand.u32 %v1255, 4294901760
    %v1604 = vsub.f32 %v1255, %v1603
    %v1605 = vand.u32 %v1604, 4294901760
    %1606 = vmatpush.msra.mxu0 %v1605
    %v1607 = vand.u32 %v86, 4294901760
    %1608 = vmatmul.f32.gmra.mxu0 %v1607
    %v1609 = vpop.f32.mrf.mxu0
    %v1610 = vadd.f32 %v1577, %v1609
    %1611 = vdwg.mxu0
    %1612 = vmatpush.msra.mxu0 0.0
    %1613 = vmatpush.msra.mxu0 0.0
    %1614 = vmatpush.msra.mxu0 0.0
    %1615 = vmatpush.msra.mxu0 0.0
    %1616 = vmatpush.msra.mxu0 0.0
    %1617 = vmatpush.msra.mxu0 0.0
    %1618 = vmatpush.msra.mxu0 0.0
    %1619 = vmatpush.msra.mxu0 0.0
    %1620 = vmatpush.msra.mxu0 0.0
    %1621 = vmatpush.msra.mxu0 0.0
    %1622 = vmatpush.msra.mxu0 0.0
    %1623 = vmatpush.msra.mxu0 0.0
    %v1624 = vand.u32 %v1261, 4294901760
    %1625 = vmatpush.msra.mxu0 %v1624
    %v1626 = vand.u32 %v1259, 4294901760
    %1627 = vmatpush.msra.mxu0 %v1626
    %v1628 = vand.u32 %v1257, 4294901760
    %1629 = vmatpush.msra.mxu0 %v1628
    %v1630 = vand.u32 %v1255, 4294901760
    %1631 = vmatpush.msra.mxu0 %v1630
    %v1632 = vand.u32 %v86, 4294901760
    %1633 = vmatmul.f32.gmra.mxu0 %v1632
    %v1634 = vpop.f32.mrf.mxu0
    %v1635 = vadd.f32 %v1610, %v1634
    %1636 = vdwg.mxu0
    %1637 = vmatpush.msra.mxu0 0.0
    %1638 = vmatpush.msra.mxu0 0.0
    %1639 = vmatpush.msra.mxu0 0.0
    %1640 = vmatpush.msra.mxu0 0.0
    %1641 = vmatpush.msra.mxu0 0.0
    %1642 = vmatpush.msra.mxu0 0.0
    %1643 = vmatpush.msra.mxu0 0.0
    %1644 = vmatpush.msra.mxu0 0.0
    %1645 = vmatpush.msra.mxu0 0.0
    %1646 = vmatpush.msra.mxu0 0.0
    %1647 = vmatpush.msra.mxu0 0.0
    %1648 = vmatpush.msra.mxu0 0.0
    %v1649 = vand.u32 %v1266, 4294901760
    %1650 = vmatpush.msra.mxu0 %v1649
    %v1651 = vand.u32 %v1265, 4294901760
    %1652 = vmatpush.msra.mxu0 %v1651
    %v1653 = vand.u32 %v1264, 4294901760
    %1654 = vmatpush.msra.mxu0 %v1653
    %v1655 = vand.u32 %v1263, 4294901760
    %1656 = vmatpush.msra.mxu0 %v1655
    %v1657 = vand.u32 %v86, 4294901760
    %v1658 = vsub.f32 %v86, %v1657
    %v1659 = vand.u32 %v1658, 4294901760
    %v1660 = vsub.f32 %v1658, %v1659
    %v1661 = vand.u32 %v1660, 4294901760
    %1662 = vmatmul.f32.gmra.mxu0 %v1661
    %v1663 = vpop.f32.mrf.mxu0
    %v1664 = vadd.f32 %v83, %v1663
    %1665 = vdwg.mxu0
    %1666 = vmatpush.msra.mxu0 0.0
    %1667 = vmatpush.msra.mxu0 0.0
    %1668 = vmatpush.msra.mxu0 0.0
    %1669 = vmatpush.msra.mxu0 0.0
    %1670 = vmatpush.msra.mxu0 0.0
    %1671 = vmatpush.msra.mxu0 0.0
    %1672 = vmatpush.msra.mxu0 0.0
    %1673 = vmatpush.msra.mxu0 0.0
    %1674 = vmatpush.msra.mxu0 0.0
    %1675 = vmatpush.msra.mxu0 0.0
    %1676 = vmatpush.msra.mxu0 0.0
    %1677 = vmatpush.msra.mxu0 0.0
    %v1678 = vand.u32 %v1266, 4294901760
    %v1679 = vsub.f32 %v1266, %v1678
    %v1680 = vand.u32 %v1679, 4294901760
    %v1681 = vsub.f32 %v1679, %v1680
    %v1682 = vand.u32 %v1681, 4294901760
    %1683 = vmatpush.msra.mxu0 %v1682
    %v1684 = vand.u32 %v1265, 4294901760
    %v1685 = vsub.f32 %v1265, %v1684
    %v1686 = vand.u32 %v1685, 4294901760
    %v1687 = vsub.f32 %v1685, %v1686
    %v1688 = vand.u32 %v1687, 4294901760
    %1689 = vmatpush.msra.mxu0 %v1688
    %v1690 = vand.u32 %v1264, 4294901760
    %v1691 = vsub.f32 %v1264, %v1690
    %v1692 = vand.u32 %v1691, 4294901760
    %v1693 = vsub.f32 %v1691, %v1692
    %v1694 = vand.u32 %v1693, 4294901760
    %1695 = vmatpush.msra.mxu0 %v1694
    %v1696 = vand.u32 %v1263, 4294901760
    %v1697 = vsub.f32 %v1263, %v1696
    %v1698 = vand.u32 %v1697, 4294901760
    %v1699 = vsub.f32 %v1697, %v1698
    %v1700 = vand.u32 %v1699, 4294901760
    %1701 = vmatpush.msra.mxu0 %v1700
    %v1702 = vand.u32 %v86, 4294901760
    %1703 = vmatmul.f32.gmra.mxu0 %v1702
    %v1704 = vpop.f32.mrf.mxu0
    %v1705 = vadd.f32 %v1664, %v1704
    %1706 = vdwg.mxu0
    %1707 = vmatpush.msra.mxu0 0.0
    %1708 = vmatpush.msra.mxu0 0.0
    %1709 = vmatpush.msra.mxu0 0.0
    %1710 = vmatpush.msra.mxu0 0.0
    %1711 = vmatpush.msra.mxu0 0.0
    %1712 = vmatpush.msra.mxu0 0.0
    %1713 = vmatpush.msra.mxu0 0.0
    %1714 = vmatpush.msra.mxu0 0.0
    %1715 = vmatpush.msra.mxu0 0.0
    %1716 = vmatpush.msra.mxu0 0.0
    %1717 = vmatpush.msra.mxu0 0.0
    %1718 = vmatpush.msra.mxu0 0.0
    %v1719 = vand.u32 %v1266, 4294901760
    %v1720 = vsub.f32 %v1266, %v1719
    %1721 = vmatpush.msra.mxu0 %v1720
    %v1722 = vand.u32 %v1265, 4294901760
    %v1723 = vsub.f32 %v1265, %v1722
    %1724 = vmatpush.msra.mxu0 %v1723
    %v1725 = vand.u32 %v1264, 4294901760
    %v1726 = vsub.f32 %v1264, %v1725
    %1727 = vmatpush.msra.mxu0 %v1726
    %v1728 = vand.u32 %v1263, 4294901760
    %v1729 = vsub.f32 %v1263, %v1728
    %1730 = vmatpush.msra.mxu0 %v1729
    %v1731 = vand.u32 %v86, 4294901760
    %v1732 = vsub.f32 %v86, %v1731
    %1733 = vmatmul.f32.gmra.mxu0 %v1732
    %v1734 = vpop.f32.mrf.mxu0
    %v1735 = vadd.f32 %v1705, %v1734
    %1736 = vdwg.mxu0
    %1737 = vmatpush.msra.mxu0 0.0
    %1738 = vmatpush.msra.mxu0 0.0
    %1739 = vmatpush.msra.mxu0 0.0
    %1740 = vmatpush.msra.mxu0 0.0
    %1741 = vmatpush.msra.mxu0 0.0
    %1742 = vmatpush.msra.mxu0 0.0
    %1743 = vmatpush.msra.mxu0 0.0
    %1744 = vmatpush.msra.mxu0 0.0
    %1745 = vmatpush.msra.mxu0 0.0
    %1746 = vmatpush.msra.mxu0 0.0
    %1747 = vmatpush.msra.mxu0 0.0
    %1748 = vmatpush.msra.mxu0 0.0
    %v1749 = vand.u32 %v1266, 4294901760
    %1750 = vmatpush.msra.mxu0 %v1749
    %v1751 = vand.u32 %v1265, 4294901760
    %1752 = vmatpush.msra.mxu0 %v1751
    %v1753 = vand.u32 %v1264, 4294901760
    %1754 = vmatpush.msra.mxu0 %v1753
    %v1755 = vand.u32 %v1263, 4294901760
    %1756 = vmatpush.msra.mxu0 %v1755
    %v1757 = vand.u32 %v86, 4294901760
    %v1758 = vsub.f32 %v86, %v1757
    %v1759 = vand.u32 %v1758, 4294901760
    %1760 = vmatmul.f32.gmra.mxu0 %v1759
    %v1761 = vpop.f32.mrf.mxu0
    %v1762 = vadd.f32 %v1735, %v1761
    %1763 = vdwg.mxu0
    %1764 = vmatpush.msra.mxu0 0.0
    %1765 = vmatpush.msra.mxu0 0.0
    %1766 = vmatpush.msra.mxu0 0.0
    %1767 = vmatpush.msra.mxu0 0.0
    %1768 = vmatpush.msra.mxu0 0.0
    %1769 = vmatpush.msra.mxu0 0.0
    %1770 = vmatpush.msra.mxu0 0.0
    %1771 = vmatpush.msra.mxu0 0.0
    %1772 = vmatpush.msra.mxu0 0.0
    %1773 = vmatpush.msra.mxu0 0.0
    %1774 = vmatpush.msra.mxu0 0.0
    %1775 = vmatpush.msra.mxu0 0.0
    %v1776 = vand.u32 %v1266, 4294901760
    %v1777 = vsub.f32 %v1266, %v1776
    %v1778 = vand.u32 %v1777, 4294901760
    %1779 = vmatpush.msra.mxu0 %v1778
    %v1780 = vand.u32 %v1265, 4294901760
    %v1781 = vsub.f32 %v1265, %v1780
    %v1782 = vand.u32 %v1781, 4294901760
    %1783 = vmatpush.msra.mxu0 %v1782
    %v1784 = vand.u32 %v1264, 4294901760
    %v1785 = vsub.f32 %v1264, %v1784
    %v1786 = vand.u32 %v1785, 4294901760
    %1787 = vmatpush.msra.mxu0 %v1786
    %v1788 = vand.u32 %v1263, 4294901760
    %v1789 = vsub.f32 %v1263, %v1788
    %v1790 = vand.u32 %v1789, 4294901760
    %1791 = vmatpush.msra.mxu0 %v1790
    %v1792 = vand.u32 %v86, 4294901760
    %1793 = vmatmul.f32.gmra.mxu0 %v1792
    %v1794 = vpop.f32.mrf.mxu0
    %v1795 = vadd.f32 %v1762, %v1794
    %1796 = vdwg.mxu0
    %1797 = vmatpush.msra.mxu0 0.0
    %1798 = vmatpush.msra.mxu0 0.0
    %1799 = vmatpush.msra.mxu0 0.0
    %1800 = vmatpush.msra.mxu0 0.0
    %1801 = vmatpush.msra.mxu0 0.0
    %1802 = vmatpush.msra.mxu0 0.0
    %1803 = vmatpush.msra.mxu0 0.0
    %1804 = vmatpush.msra.mxu0 0.0
    %1805 = vmatpush.msra.mxu0 0.0
    %1806 = vmatpush.msra.mxu0 0.0
    %1807 = vmatpush.msra.mxu0 0.0
    %1808 = vmatpush.msra.mxu0 0.0
    %v1809 = vand.u32 %v1266, 4294901760
    %1810 = vmatpush.msra.mxu0 %v1809
    %v1811 = vand.u32 %v1265, 4294901760
    %1812 = vmatpush.msra.mxu0 %v1811
    %v1813 = vand.u32 %v1264, 4294901760
    %1814 = vmatpush.msra.mxu0 %v1813
    %v1815 = vand.u32 %v1263, 4294901760
    %1816 = vmatpush.msra.mxu0 %v1815
    %v1817 = vand.u32 %v86, 4294901760
    %1818 = vmatmul.f32.gmra.mxu0 %v1817
    %v1819 = vpop.f32.mrf.mxu0
    %v1820 = vadd.f32 %v1795, %v1819
    %1821 = vdwg.mxu0
    %v1822 = vmul.f32 %v1820, %v58
    %v1823 = vsel %vm644, %v1450, -inf
    %v1824 = vsel %vm646, %v1635, -inf
    %v1825 = vmax.f32 %v1823, %v1824
    %1826 = vmax.xlane.f32.xlu0 %v1825
    %v1827 = vpop.xlane.xlu0 %1826
    %v1828 = vsel %vm651, %v1822, -inf
    %1829 = vmax.xlane.f32.xlu0 %v1828
    %v1830 = vpop.xlane.xlu0 %1829
    %v1831 = vmax.f32 %v1827, %v1830
    %v1832 = vsub.f32 %v1450, %v1831
    %v1833 = vsub.f32 %v1635, %v1831
    %v1834 = vmul.f32 %v1832, 1.442695
    %v1835 = vpow.pop %v1834
    %v1836 = vmul.f32 %v1833, 1.442695
    %v1837 = vpow.pop %v1836
    %v1838 = vsub.f32 %v1822, %v1831
    %v1839 = vmul.f32 %v1838, 1.442695
    %v1840 = vpow.pop %v1839
    %v1841 = vsel %vm644, %v1835, 0.0
    %v1842 = vsel %vm646, %v1837, 0.0
    %v1843 = vadd.f32 %v1841, %v1842
    %1844 = vadd.xlane.f32.xlu0 %v1843
    %v1845 = vpop.xlane.xlu0 %1844
    %v1846 = vsel %vm651, %v1840, 0.0
    %1847 = vadd.xlane.f32.xlu0 %v1846
    %v1848 = vpop.xlane.xlu0 %1847
    %v1849 = vadd.f32 %v1845, %v1848
    %v1850 = vrcp.pop %v1849
    %v1851 = vmul.f32 %v1849, %v1850
    %v1852 = vsub.f32 2.0, %v1851
    %v1853 = vmul.f32 %v1850, %v1852
    %v1854 = vperm.slane %v1840, 0
    %v1855 = vmul.f32 %v1263, %v1854
    %v1856 = vmul.f32 %v1264, %v1854
    %v1857 = vmul.f32 %v1265, %v1854
    %v1858 = vmul.f32 %v1266, %v1854
    %v1859 = vsel %vm683, %v1855, 0.0
    %1860 = vadd.xlane.f32.xlu0 %v1859
    %v1861 = vpop.xlane.xlu0 %1860
    %v1862 = vsel %vm683, %v1856, 0.0
    %1863 = vadd.xlane.f32.xlu0 %v1862
    %v1864 = vpop.xlane.xlu0 %1863
    %v1865 = vsel %vm683, %v1857, 0.0
    %1866 = vadd.xlane.f32.xlu0 %v1865
    %v1867 = vpop.xlane.xlu0 %1866
    %v1868 = vsel %vm683, %v1858, 0.0
    %1869 = vadd.xlane.f32.xlu0 %v1868
    %v1870 = vpop.xlane.xlu0 %1869
    %v1871 = vperm.slane %v1835, 0
    %v1872 = vperm.slane %v1837, 0
    %v1873 = vmul.f32 %v1254, %v1871
    %v1874 = vmul.f32 %v1255, %v1872
    %v1875 = vmul.f32 %v1256, %v1871
    %v1876 = vmul.f32 %v1257, %v1872
    %v1877 = vmul.f32 %v1258, %v1871
    %v1878 = vmul.f32 %v1259, %v1872
    %v1879 = vmul.f32 %v1260, %v1871
    %v1880 = vmul.f32 %v1261, %v1872
    %v1881 = vsel %vm706, %v1874, 0.0
    %v1882 = vadd.f32 %v1873, %v1881
    %1883 = vadd.xlane.f32.xlu0 %v1882
    %v1884 = vpop.xlane.xlu0 %1883
    %v1885 = vadd.f32 %v1884, %v1861
    %v1886 = vsel %vm706, %v1876, 0.0
    %v1887 = vadd.f32 %v1875, %v1886
    %1888 = vadd.xlane.f32.xlu0 %v1887
    %v1889 = vpop.xlane.xlu0 %1888
    %v1890 = vadd.f32 %v1889, %v1864
    %v1891 = vsel %vm706, %v1878, 0.0
    %v1892 = vadd.f32 %v1877, %v1891
    %1893 = vadd.xlane.f32.xlu0 %v1892
    %v1894 = vpop.xlane.xlu0 %1893
    %v1895 = vadd.f32 %v1894, %v1867
    %v1896 = vsel %vm706, %v1880, 0.0
    %v1897 = vadd.f32 %v1879, %v1896
    %1898 = vadd.xlane.f32.xlu0 %v1897
    %v1899 = vpop.xlane.xlu0 %1898
    %v1900 = vadd.f32 %v1899, %v1870
    %v1901 = vperm.slane %v1853, 0
    %v1902 = vmul.f32 %v1885, %v1901
    %v1903 = vmul.f32 %v1890, %v1901
    %v1904 = vmul.f32 %v1895, %v1901
    %v1905 = vmul.f32 %v1900, %v1901
    %1906 = vmatpush.msra.mxu0 0.0
    %1907 = vmatpush.msra.mxu0 0.0
    %1908 = vmatpush.msra.mxu0 0.0
    %1909 = vmatpush.msra.mxu0 0.0
    %1910 = vmatpush.msra.mxu0 0.0
    %1911 = vmatpush.msra.mxu0 0.0
    %1912 = vmatpush.msra.mxu0 0.0
    %1913 = vmatpush.msra.mxu0 0.0
    %1914 = vmatpush.msra.mxu0 0.0
    %1915 = vmatpush.msra.mxu0 0.0
    %1916 = vmatpush.msra.mxu0 0.0
    %1917 = vmatpush.msra.mxu0 0.0
    %v1918 = vand.u32 %v1905, 4294901760
    %1919 = vmatpush.msra.mxu0 %v1918
    %v1920 = vand.u32 %v1904, 4294901760
    %1921 = vmatpush.msra.mxu0 %v1920
    %v1922 = vand.u32 %v1903, 4294901760
    %1923 = vmatpush.msra.mxu0 %v1922
    %v1924 = vand.u32 %v1902, 4294901760
    %1925 = vmatpush.msra.mxu0 %v1924
    %v1926 = vand.u32 %v733, 4294901760
    %v1927 = vsub.f32 %v733, %v1926
    %v1928 = vand.u32 %v1927, 4294901760
    %v1929 = vsub.f32 %v1927, %v1928
    %v1930 = vand.u32 %v1929, 4294901760
    %1931 = vmatmul.f32.gmra.mxu0 %v1930
    %v1932 = vpop.f32.mrf.mxu0
    %v1933 = vadd.f32 %v60, %v1932
    %1934 = vdwg.mxu0
    %1935 = vmatpush.msra.mxu0 0.0
    %1936 = vmatpush.msra.mxu0 0.0
    %1937 = vmatpush.msra.mxu0 0.0
    %1938 = vmatpush.msra.mxu0 0.0
    %1939 = vmatpush.msra.mxu0 0.0
    %1940 = vmatpush.msra.mxu0 0.0
    %1941 = vmatpush.msra.mxu0 0.0
    %1942 = vmatpush.msra.mxu0 0.0
    %1943 = vmatpush.msra.mxu0 0.0
    %1944 = vmatpush.msra.mxu0 0.0
    %1945 = vmatpush.msra.mxu0 0.0
    %1946 = vmatpush.msra.mxu0 0.0
    %v1947 = vand.u32 %v1905, 4294901760
    %v1948 = vsub.f32 %v1905, %v1947
    %v1949 = vand.u32 %v1948, 4294901760
    %v1950 = vsub.f32 %v1948, %v1949
    %v1951 = vand.u32 %v1950, 4294901760
    %1952 = vmatpush.msra.mxu0 %v1951
    %v1953 = vand.u32 %v1904, 4294901760
    %v1954 = vsub.f32 %v1904, %v1953
    %v1955 = vand.u32 %v1954, 4294901760
    %v1956 = vsub.f32 %v1954, %v1955
    %v1957 = vand.u32 %v1956, 4294901760
    %1958 = vmatpush.msra.mxu0 %v1957
    %v1959 = vand.u32 %v1903, 4294901760
    %v1960 = vsub.f32 %v1903, %v1959
    %v1961 = vand.u32 %v1960, 4294901760
    %v1962 = vsub.f32 %v1960, %v1961
    %v1963 = vand.u32 %v1962, 4294901760
    %1964 = vmatpush.msra.mxu0 %v1963
    %v1965 = vand.u32 %v1902, 4294901760
    %v1966 = vsub.f32 %v1902, %v1965
    %v1967 = vand.u32 %v1966, 4294901760
    %v1968 = vsub.f32 %v1966, %v1967
    %v1969 = vand.u32 %v1968, 4294901760
    %1970 = vmatpush.msra.mxu0 %v1969
    %v1971 = vand.u32 %v733, 4294901760
    %1972 = vmatmul.f32.gmra.mxu0 %v1971
    %v1973 = vpop.f32.mrf.mxu0
    %v1974 = vadd.f32 %v1933, %v1973
    %1975 = vdwg.mxu0
    %1976 = vmatpush.msra.mxu0 0.0
    %1977 = vmatpush.msra.mxu0 0.0
    %1978 = vmatpush.msra.mxu0 0.0
    %1979 = vmatpush.msra.mxu0 0.0
    %1980 = vmatpush.msra.mxu0 0.0
    %1981 = vmatpush.msra.mxu0 0.0
    %1982 = vmatpush.msra.mxu0 0.0
    %1983 = vmatpush.msra.mxu0 0.0
    %1984 = vmatpush.msra.mxu0 0.0
    %1985 = vmatpush.msra.mxu0 0.0
    %1986 = vmatpush.msra.mxu0 0.0
    %1987 = vmatpush.msra.mxu0 0.0
    %v1988 = vand.u32 %v1905, 4294901760
    %v1989 = vsub.f32 %v1905, %v1988
    %1990 = vmatpush.msra.mxu0 %v1989
    %v1991 = vand.u32 %v1904, 4294901760
    %v1992 = vsub.f32 %v1904, %v1991
    %1993 = vmatpush.msra.mxu0 %v1992
    %v1994 = vand.u32 %v1903, 4294901760
    %v1995 = vsub.f32 %v1903, %v1994
    %1996 = vmatpush.msra.mxu0 %v1995
    %v1997 = vand.u32 %v1902, 4294901760
    %v1998 = vsub.f32 %v1902, %v1997
    %1999 = vmatpush.msra.mxu0 %v1998
    %v2000 = vand.u32 %v733, 4294901760
    %v2001 = vsub.f32 %v733, %v2000
    %2002 = vmatmul.f32.gmra.mxu0 %v2001
    %v2003 = vpop.f32.mrf.mxu0
    %v2004 = vadd.f32 %v1974, %v2003
    %2005 = vdwg.mxu0
    %2006 = vmatpush.msra.mxu0 0.0
    %2007 = vmatpush.msra.mxu0 0.0
    %2008 = vmatpush.msra.mxu0 0.0
    %2009 = vmatpush.msra.mxu0 0.0
    %2010 = vmatpush.msra.mxu0 0.0
    %2011 = vmatpush.msra.mxu0 0.0
    %2012 = vmatpush.msra.mxu0 0.0
    %2013 = vmatpush.msra.mxu0 0.0
    %2014 = vmatpush.msra.mxu0 0.0
    %2015 = vmatpush.msra.mxu0 0.0
    %2016 = vmatpush.msra.mxu0 0.0
    %2017 = vmatpush.msra.mxu0 0.0
    %v2018 = vand.u32 %v1905, 4294901760
    %2019 = vmatpush.msra.mxu0 %v2018
    %v2020 = vand.u32 %v1904, 4294901760
    %2021 = vmatpush.msra.mxu0 %v2020
    %v2022 = vand.u32 %v1903, 4294901760
    %2023 = vmatpush.msra.mxu0 %v2022
    %v2024 = vand.u32 %v1902, 4294901760
    %2025 = vmatpush.msra.mxu0 %v2024
    %v2026 = vand.u32 %v733, 4294901760
    %v2027 = vsub.f32 %v733, %v2026
    %v2028 = vand.u32 %v2027, 4294901760
    %2029 = vmatmul.f32.gmra.mxu0 %v2028
    %v2030 = vpop.f32.mrf.mxu0
    %v2031 = vadd.f32 %v2004, %v2030
    %2032 = vdwg.mxu0
    %2033 = vmatpush.msra.mxu0 0.0
    %2034 = vmatpush.msra.mxu0 0.0
    %2035 = vmatpush.msra.mxu0 0.0
    %2036 = vmatpush.msra.mxu0 0.0
    %2037 = vmatpush.msra.mxu0 0.0
    %2038 = vmatpush.msra.mxu0 0.0
    %2039 = vmatpush.msra.mxu0 0.0
    %2040 = vmatpush.msra.mxu0 0.0
    %2041 = vmatpush.msra.mxu0 0.0
    %2042 = vmatpush.msra.mxu0 0.0
    %2043 = vmatpush.msra.mxu0 0.0
    %2044 = vmatpush.msra.mxu0 0.0
    %v2045 = vand.u32 %v1905, 4294901760
    %v2046 = vsub.f32 %v1905, %v2045
    %v2047 = vand.u32 %v2046, 4294901760
    %2048 = vmatpush.msra.mxu0 %v2047
    %v2049 = vand.u32 %v1904, 4294901760
    %v2050 = vsub.f32 %v1904, %v2049
    %v2051 = vand.u32 %v2050, 4294901760
    %2052 = vmatpush.msra.mxu0 %v2051
    %v2053 = vand.u32 %v1903, 4294901760
    %v2054 = vsub.f32 %v1903, %v2053
    %v2055 = vand.u32 %v2054, 4294901760
    %2056 = vmatpush.msra.mxu0 %v2055
    %v2057 = vand.u32 %v1902, 4294901760
    %v2058 = vsub.f32 %v1902, %v2057
    %v2059 = vand.u32 %v2058, 4294901760
    %2060 = vmatpush.msra.mxu0 %v2059
    %v2061 = vand.u32 %v733, 4294901760
    %2062 = vmatmul.f32.gmra.mxu0 %v2061
    %v2063 = vpop.f32.mrf.mxu0
    %v2064 = vadd.f32 %v2031, %v2063
    %2065 = vdwg.mxu0
    %2066 = vmatpush.msra.mxu0 0.0
    %2067 = vmatpush.msra.mxu0 0.0
    %2068 = vmatpush.msra.mxu0 0.0
    %2069 = vmatpush.msra.mxu0 0.0
    %2070 = vmatpush.msra.mxu0 0.0
    %2071 = vmatpush.msra.mxu0 0.0
    %2072 = vmatpush.msra.mxu0 0.0
    %2073 = vmatpush.msra.mxu0 0.0
    %2074 = vmatpush.msra.mxu0 0.0
    %2075 = vmatpush.msra.mxu0 0.0
    %2076 = vmatpush.msra.mxu0 0.0
    %2077 = vmatpush.msra.mxu0 0.0
    %v2078 = vand.u32 %v1905, 4294901760
    %2079 = vmatpush.msra.mxu0 %v2078
    %v2080 = vand.u32 %v1904, 4294901760
    %2081 = vmatpush.msra.mxu0 %v2080
    %v2082 = vand.u32 %v1903, 4294901760
    %2083 = vmatpush.msra.mxu0 %v2082
    %v2084 = vand.u32 %v1902, 4294901760
    %2085 = vmatpush.msra.mxu0 %v2084
    %v2086 = vand.u32 %v733, 4294901760
    %2087 = vmatmul.f32.gmra.mxu0 %v2086
    %v2088 = vpop.f32.mrf.mxu0
    %v2089 = vadd.f32 %v2064, %v2088
    %2090 = vdwg.mxu0
    %v2091 = vsel %vm920, %v2089, 0.0
    %v2092 = vrot.slane %v2091, 4
    %v2093 = vadd.f32 %v2091, %v2092
    %v2094 = vrot.slane %v2093, 2
    %v2095 = vadd.f32 %v2093, %v2094
    %v2096 = vrot.slane %v2095, 1
    %v2097 = vadd.f32 %v2095, %v2096
    %v2098 = vmul.f32 %v2097, %v934
    %v2099 = vsub.f32 %v2089, %v2098
    %v2100 = vmul.f32 %v2099, %v2099
    %v2101 = vsel %vm920, %v2100, 0.0
    %v2102 = vrot.slane %v2101, 4
    %v2103 = vadd.f32 %v2101, %v2102
    %v2104 = vrot.slane %v2103, 2
    %v2105 = vadd.f32 %v2103, %v2104
    %v2106 = vrot.slane %v2105, 1
    %v2107 = vadd.f32 %v2105, %v2106
    %v2108 = vmul.f32 %v2107, %v934
    %v2109 = vadd.f32 %v2108, 1e-05
    %v2110 = vrsqrt.pop %v2109
    %v2111 = vmul.f32 %v2110, %v2109
    %v2112 = vmul.f32 %v2111, %v2110
    %v2113 = vmul.f32 0.5, %v2112
    %v2114 = vsub.f32 1.5, %v2113
    %v2115 = vmul.f32 %v2110, %v2114
    %vm2116 = vweird.f32 %v2109
    %vm2117 = vweird.f32 %v2110
    %vm2118 = vmor %vm2116, %vm2117
    %v2119 = vsel %vm2118, %v2110, %v2115
    %v2120 = vmul.f32 %v2099, %v2119
    %v2121 = vmul.f32 %v2120, %v61
    %v2122 = vadd.f32 %v2121, %v62
    %v2123 = vmax.f32 %v2122, 0.0
    %v2125 = vsel %vm974, %v2123, 0
    %2127 = vmatpush.msra.mxu0 0.0
    %2128 = vmatpush.msra.mxu0 0.0
    %2129 = vmatpush.msra.mxu0 0.0
    %2130 = vmatpush.msra.mxu0 0.0
    %2131 = vmatpush.msra.mxu0 0.0
    %2132 = vmatpush.msra.mxu0 0.0
    %2133 = vmatpush.msra.mxu0 0.0
    %2134 = vmatpush.msra.mxu0 0.0
    %2135 = vmatpush.msra.mxu0 0.0
    %2136 = vmatpush.msra.mxu0 0.0
    %2137 = vmatpush.msra.mxu0 0.0
    %2138 = vmatpush.msra.mxu0 0.0
    %2139 = vmatpush.msra.mxu0 0.0
    %2140 = vmatpush.msra.mxu0 0.0
    %2141 = vmatpush.msra.mxu0 0.0
    %v2142 = vand.u32 %v2125, 4294901760
    %2143 = vmatpush.msra.mxu0 %v2142
    %v2144 = vand.u32 %v963, 4294901760
    %v2145 = vsub.f32 %v963, %v2144
    %v2146 = vand.u32 %v2145, 4294901760
    %v2147 = vsub.f32 %v2145, %v2146
    %v2148 = vand.u32 %v2147, 4294901760
    %2149 = vmatmul.f32.gmra.mxu0 %v2148
    %v2150 = vpop.f32.mrf.mxu0
    %v2151 = vadd.f32 %v67, %v2150
    %v2152 = vand.u32 %v966, 4294901760
    %v2153 = vsub.f32 %v966, %v2152
    %v2154 = vand.u32 %v2153, 4294901760
    %v2155 = vsub.f32 %v2153, %v2154
    %v2156 = vand.u32 %v2155, 4294901760
    %2157 = vmatmul.f32.gmra.mxu0 %v2156
    %v2158 = vpop.f32.mrf.mxu0
    %v2159 = vadd.f32 %v68, %v2158
    %v2160 = vand.u32 %v969, 4294901760
    %v2161 = vsub.f32 %v969, %v2160
    %v2162 = vand.u32 %v2161, 4294901760
    %v2163 = vsub.f32 %v2161, %v2162
    %v2164 = vand.u32 %v2163, 4294901760
    %2165 = vmatmul.f32.gmra.mxu0 %v2164
    %v2166 = vpop.f32.mrf.mxu0
    %v2167 = vadd.f32 %v69, %v2166
    %v2168 = vand.u32 %v972, 4294901760
    %v2169 = vsub.f32 %v972, %v2168
    %v2170 = vand.u32 %v2169, 4294901760
    %v2171 = vsub.f32 %v2169, %v2170
    %v2172 = vand.u32 %v2171, 4294901760
    %2173 = vmatmul.f32.gmra.mxu0 %v2172
    %v2174 = vpop.f32.mrf.mxu0
    %v2175 = vadd.f32 %v70, %v2174
    %2176 = vdwg.mxu0
    %2177 = vmatpush.msra.mxu0 0.0
    %2178 = vmatpush.msra.mxu0 0.0
    %2179 = vmatpush.msra.mxu0 0.0
    %2180 = vmatpush.msra.mxu0 0.0
    %2181 = vmatpush.msra.mxu0 0.0
    %2182 = vmatpush.msra.mxu0 0.0
    %2183 = vmatpush.msra.mxu0 0.0
    %2184 = vmatpush.msra.mxu0 0.0
    %2185 = vmatpush.msra.mxu0 0.0
    %2186 = vmatpush.msra.mxu0 0.0
    %2187 = vmatpush.msra.mxu0 0.0
    %2188 = vmatpush.msra.mxu0 0.0
    %2189 = vmatpush.msra.mxu0 0.0
    %2190 = vmatpush.msra.mxu0 0.0
    %2191 = vmatpush.msra.mxu0 0.0
    %v2192 = vand.u32 %v2125, 4294901760
    %v2193 = vsub.f32 %v2125, %v2192
    %v2194 = vand.u32 %v2193, 4294901760
    %v2195 = vsub.f32 %v2193, %v2194
    %v2196 = vand.u32 %v2195, 4294901760
    %2197 = vmatpush.msra.mxu0 %v2196
    %v2198 = vand.u32 %v963, 4294901760
    %2199 = vmatmul.f32.gmra.mxu0 %v2198
    %v2200 = vpop.f32.mrf.mxu0
    %v2201 = vadd.f32 %v2151, %v2200
    %v2202 = vand.u32 %v966, 4294901760
    %2203 = vmatmul.f32.gmra.mxu0 %v2202
    %v2204 = vpop.f32.mrf.mxu0
    %v2205 = vadd.f32 %v2159, %v2204
    %v2206 = vand.u32 %v969, 4294901760
    %2207 = vmatmul.f32.gmra.mxu0 %v2206
    %v2208 = vpop.f32.mrf.mxu0
    %v2209 = vadd.f32 %v2167, %v2208
    %v2210 = vand.u32 %v972, 4294901760
    %2211 = vmatmul.f32.gmra.mxu0 %v2210
    %v2212 = vpop.f32.mrf.mxu0
    %v2213 = vadd.f32 %v2175, %v2212
    %2214 = vdwg.mxu0
    %2215 = vmatpush.msra.mxu0 0.0
    %2216 = vmatpush.msra.mxu0 0.0
    %2217 = vmatpush.msra.mxu0 0.0
    %2218 = vmatpush.msra.mxu0 0.0
    %2219 = vmatpush.msra.mxu0 0.0
    %2220 = vmatpush.msra.mxu0 0.0
    %2221 = vmatpush.msra.mxu0 0.0
    %2222 = vmatpush.msra.mxu0 0.0
    %2223 = vmatpush.msra.mxu0 0.0
    %2224 = vmatpush.msra.mxu0 0.0
    %2225 = vmatpush.msra.mxu0 0.0
    %2226 = vmatpush.msra.mxu0 0.0
    %2227 = vmatpush.msra.mxu0 0.0
    %2228 = vmatpush.msra.mxu0 0.0
    %2229 = vmatpush.msra.mxu0 0.0
    %v2230 = vand.u32 %v2125, 4294901760
    %v2231 = vsub.f32 %v2125, %v2230
    %2232 = vmatpush.msra.mxu0 %v2231
    %v2233 = vand.u32 %v963, 4294901760
    %v2234 = vsub.f32 %v963, %v2233
    %2235 = vmatmul.f32.gmra.mxu0 %v2234
    %v2236 = vpop.f32.mrf.mxu0
    %v2237 = vadd.f32 %v2201, %v2236
    %v2238 = vand.u32 %v966, 4294901760
    %v2239 = vsub.f32 %v966, %v2238
    %2240 = vmatmul.f32.gmra.mxu0 %v2239
    %v2241 = vpop.f32.mrf.mxu0
    %v2242 = vadd.f32 %v2205, %v2241
    %v2243 = vand.u32 %v969, 4294901760
    %v2244 = vsub.f32 %v969, %v2243
    %2245 = vmatmul.f32.gmra.mxu0 %v2244
    %v2246 = vpop.f32.mrf.mxu0
    %v2247 = vadd.f32 %v2209, %v2246
    %v2248 = vand.u32 %v972, 4294901760
    %v2249 = vsub.f32 %v972, %v2248
    %2250 = vmatmul.f32.gmra.mxu0 %v2249
    %v2251 = vpop.f32.mrf.mxu0
    %v2252 = vadd.f32 %v2213, %v2251
    %2253 = vdwg.mxu0
    %2254 = vmatpush.msra.mxu0 0.0
    %2255 = vmatpush.msra.mxu0 0.0
    %2256 = vmatpush.msra.mxu0 0.0
    %2257 = vmatpush.msra.mxu0 0.0
    %2258 = vmatpush.msra.mxu0 0.0
    %2259 = vmatpush.msra.mxu0 0.0
    %2260 = vmatpush.msra.mxu0 0.0
    %2261 = vmatpush.msra.mxu0 0.0
    %2262 = vmatpush.msra.mxu0 0.0
    %2263 = vmatpush.msra.mxu0 0.0
    %2264 = vmatpush.msra.mxu0 0.0
    %2265 = vmatpush.msra.mxu0 0.0
    %2266 = vmatpush.msra.mxu0 0.0
    %2267 = vmatpush.msra.mxu0 0.0
    %2268 = vmatpush.msra.mxu0 0.0
    %v2269 = vand.u32 %v2125, 4294901760
    %2270 = vmatpush.msra.mxu0 %v2269
    %v2271 = vand.u32 %v963, 4294901760
    %v2272 = vsub.f32 %v963, %v2271
    %v2273 = vand.u32 %v2272, 4294901760
    %2274 = vmatmul.f32.gmra.mxu0 %v2273
    %v2275 = vpop.f32.mrf.mxu0
    %v2276 = vadd.f32 %v2237, %v2275
    %v2277 = vand.u32 %v966, 4294901760
    %v2278 = vsub.f32 %v966, %v2277
    %v2279 = vand.u32 %v2278, 4294901760
    %2280 = vmatmul.f32.gmra.mxu0 %v2279
    %v2281 = vpop.f32.mrf.mxu0
    %v2282 = vadd.f32 %v2242, %v2281
    %v2283 = vand.u32 %v969, 4294901760
    %v2284 = vsub.f32 %v969, %v2283
    %v2285 = vand.u32 %v2284, 4294901760
    %2286 = vmatmul.f32.gmra.mxu0 %v2285
    %v2287 = vpop.f32.mrf.mxu0
    %v2288 = vadd.f32 %v2247, %v2287
    %v2289 = vand.u32 %v972, 4294901760
    %v2290 = vsub.f32 %v972, %v2289
    %v2291 = vand.u32 %v2290, 4294901760
    %2292 = vmatmul.f32.gmra.mxu0 %v2291
    %v2293 = vpop.f32.mrf.mxu0
    %v2294 = vadd.f32 %v2252, %v2293
    %2295 = vdwg.mxu0
    %2296 = vmatpush.msra.mxu0 0.0
    %2297 = vmatpush.msra.mxu0 0.0
    %2298 = vmatpush.msra.mxu0 0.0
    %2299 = vmatpush.msra.mxu0 0.0
    %2300 = vmatpush.msra.mxu0 0.0
    %2301 = vmatpush.msra.mxu0 0.0
    %2302 = vmatpush.msra.mxu0 0.0
    %2303 = vmatpush.msra.mxu0 0.0
    %2304 = vmatpush.msra.mxu0 0.0
    %2305 = vmatpush.msra.mxu0 0.0
    %2306 = vmatpush.msra.mxu0 0.0
    %2307 = vmatpush.msra.mxu0 0.0
    %2308 = vmatpush.msra.mxu0 0.0
    %2309 = vmatpush.msra.mxu0 0.0
    %2310 = vmatpush.msra.mxu0 0.0
    %v2311 = vand.u32 %v2125, 4294901760
    %v2312 = vsub.f32 %v2125, %v2311
    %v2313 = vand.u32 %v2312, 4294901760
    %2314 = vmatpush.msra.mxu0 %v2313
    %v2315 = vand.u32 %v963, 4294901760
    %2316 = vmatmul.f32.gmra.mxu0 %v2315
    %v2317 = vpop.f32.mrf.mxu0
    %v2318 = vadd.f32 %v2276, %v2317
    %v2319 = vand.u32 %v966, 4294901760
    %2320 = vmatmul.f32.gmra.mxu0 %v2319
    %v2321 = vpop.f32.mrf.mxu0
    %v2322 = vadd.f32 %v2282, %v2321
    %v2323 = vand.u32 %v969, 4294901760
    %2324 = vmatmul.f32.gmra.mxu0 %v2323
    %v2325 = vpop.f32.mrf.mxu0
    %v2326 = vadd.f32 %v2288, %v2325
    %v2327 = vand.u32 %v972, 4294901760
    %2328 = vmatmul.f32.gmra.mxu0 %v2327
    %v2329 = vpop.f32.mrf.mxu0
    %v2330 = vadd.f32 %v2294, %v2329
    %2331 = vdwg.mxu0
    %2332 = vmatpush.msra.mxu0 0.0
    %2333 = vmatpush.msra.mxu0 0.0
    %2334 = vmatpush.msra.mxu0 0.0
    %2335 = vmatpush.msra.mxu0 0.0
    %2336 = vmatpush.msra.mxu0 0.0
    %2337 = vmatpush.msra.mxu0 0.0
    %2338 = vmatpush.msra.mxu0 0.0
    %2339 = vmatpush.msra.mxu0 0.0
    %2340 = vmatpush.msra.mxu0 0.0
    %2341 = vmatpush.msra.mxu0 0.0
    %2342 = vmatpush.msra.mxu0 0.0
    %2343 = vmatpush.msra.mxu0 0.0
    %2344 = vmatpush.msra.mxu0 0.0
    %2345 = vmatpush.msra.mxu0 0.0
    %2346 = vmatpush.msra.mxu0 0.0
    %v2347 = vand.u32 %v2125, 4294901760
    %2348 = vmatpush.msra.mxu0 %v2347
    %v2349 = vand.u32 %v963, 4294901760
    %2350 = vmatmul.f32.gmra.mxu0 %v2349
    %v2351 = vpop.f32.mrf.mxu0
    %v2352 = vadd.f32 %v2318, %v2351
    %v2353 = vand.u32 %v966, 4294901760
    %2354 = vmatmul.f32.gmra.mxu0 %v2353
    %v2355 = vpop.f32.mrf.mxu0
    %v2356 = vadd.f32 %v2322, %v2355
    %v2357 = vand.u32 %v969, 4294901760
    %2358 = vmatmul.f32.gmra.mxu0 %v2357
    %v2359 = vpop.f32.mrf.mxu0
    %v2360 = vadd.f32 %v2326, %v2359
    %v2361 = vand.u32 %v972, 4294901760
    %2362 = vmatmul.f32.gmra.mxu0 %v2361
    %v2363 = vpop.f32.mrf.mxu0
    %v2364 = vadd.f32 %v2330, %v2363
    %2365 = vdwg.mxu0
    %2367 = vset.pattern.permute.xlu0 0
    %2368 = vperm.xlu0 %2367, %v2352
    %v2369 = vpop.permute.xlu0 %2368
    %2372 = vset.pattern.permute.xlu0 0
    %2373 = vperm.xlu0 %2372, %v2356
    %v2374 = vpop.permute.xlu0 %2373
    %2377 = vset.pattern.permute.xlu0 0
    %2378 = vperm.xlu0 %2377, %v2360
    %v2379 = vpop.permute.xlu0 %2378
    %2382 = vset.pattern.permute.xlu0 0
    %2383 = vperm.xlu0 %2382, %v2364
    %v2384 = vpop.permute.xlu0 %2383
    %v2386 = vadd.f32 %v1254, %v2369
    %v2387 = vadd.f32 %v1255, %v2369
    %v2388 = vadd.f32 %v1256, %v2374
    %v2389 = vadd.f32 %v1257, %v2374
    %v2390 = vadd.f32 %v1258, %v2379
    %v2391 = vadd.f32 %v1259, %v2379
    %v2392 = vadd.f32 %v1260, %v2384
    %v2393 = vadd.f32 %v1261, %v2384
    %s2394 = scalar_lea.vmem [#allocation6], 64
    %2395 = vst [vmem:[%s2394] sm:$0xff] %v2386
    %2396 = vst.msk [vmem:[%s2394 + $0x8] sm:$0xff] %vm706, %v2387
    %2397 = vst [vmem:[%s2394 + $0x10] sm:$0xff] %v2388
    %2398 = vst.msk [vmem:[%s2394 + $0x18] sm:$0xff] %vm706, %v2389
    %2399 = vst [vmem:[%s2394 + $0x20] sm:$0xff] %v2390
    %2400 = vst.msk [vmem:[%s2394 + $0x28] sm:$0xff] %vm706, %v2391
    %2401 = vst [vmem:[%s2394 + $0x30] sm:$0xff] %v2392
    %2402 = vst.msk [vmem:[%s2394 + $0x38] sm:$0xff] %vm706, %v2393
    // Predicated region
    $region50: #{tpu_custom_call.1} parent=1 // pred_check
      _
    $region51: #{tpu_custom_call.1} parent=1 // pred_check_branch
      %2404 = sbr.rel (0) target = $region53
    $region52: #{tpu_custom_call.1} parent=1 // pred_region
      %2406 = vsyncadd [#allocation5], 0
      %s2407 = sshll.u32 [#allocation6], 4
      %s2408 = int_to_ptr.vmem [resolvable:$true] %s2407
      %s2409 = sshll.u32 %s11, 4
      %s2410 = int_to_ptr.hbm [resolvable:$true] %s2409
      %2415 = dma.vmem_to_hbm [thread:$0]  %s2408, 2048, %s2410, [#allocation5], 256, 256, 16
    $region53: #{tpu_custom_call.1} parent=1 // pred_fallthru
      _
    // Predicated region
    $region54: #{tpu_custom_call.1} parent=1 // pred_check
      _
    $region55: #{tpu_custom_call.1} parent=1 // pred_check_branch
      %2417 = sbr.rel (0) target = $region57
    $region56: #{tpu_custom_call.1} parent=1 // pred_region
      %2419 = dma.done [#allocation5], 2048
    $region57: #{tpu_custom_call.1} parent=1 // pred_fallthru
      _
    %2420 = vsyncpa [#allocation4], 1
    %2421 = vsyncpa [#allocation5], 1

</llo_original>
